<compile_context>
chip_gen: v5e
topology: v5e:2x2
jax: 0.10.0
libtpu: 0.0.40
codegen_flags: <defaults>
</compile_context>

<pallas_src>
import functools

import numpy as np
import jax
import jax.numpy as jnp
from jax.experimental import pallas as pl
from jax.experimental.pallas import tpu as pltpu

LANE = 128   # TPU lane width: pad all channel-like dims to this
SUB = 8      # TPU sublane width: pad row-like dims to a multiple of this


def _round_up(n, m):
    return ((n + m - 1) // m) * m


def _pad2_np(a, rows, cols):
    a = np.asarray(a, np.float32)
    r, c = a.shape
    out = np.zeros((rows, cols), np.float32)
    out[:r, :c] = a
    return out


# ---------------------------------------------------------------------------
# One-time parameter preparation (hoisted out of the per-forward hot path):
# pad weights/biases to (128, 128)/(1, 128), cast the big conv weights to bf16,
# and build the per-batch pooling matrix as a numpy constant.
# ---------------------------------------------------------------------------
def prepare_params(params, img_shape):
    B, C_in, H, W = img_shape
    HW = H * W
    BHW = B * HW
    BHW_p = _round_up(BHW, SUB)
    Bp = _round_up(max(B, SUB), SUB)
    C = params["conv1_w"].shape[1]
    K = params["head_w"].shape[1]

    # Per-batch mean-over-HW pooling matrix (Bp, BHW_p); padded rows/cols are zero.
    pool = np.zeros((Bp, BHW_p), np.float32)
    for b in range(B):
        pool[b, b * HW:(b + 1) * HW] = 1.0 / HW

    pw32 = lambda w: jnp.asarray(_pad2_np(w, LANE, LANE))                        # f32 (128,128)
    pw16 = lambda w: jnp.asarray(_pad2_np(w, LANE, LANE), dtype=jnp.bfloat16)    # bf16 (128,128)
    pb = lambda b: jnp.asarray(_pad2_np(b, 1, LANE))                             # f32 (1,128)

    return dict(
        B=B, C_in=C_in, HW=HW, BHW=BHW, BHW_p=BHW_p, Bp=Bp, C=C, K=K,
        pool=jnp.asarray(pool),
        conv1_w=pw16(params["conv1_w"]), conv1_b=pb(params["conv1_b"]),
        se1_w1=pw32(params["se1_w1"]), se1_b1=pb(params["se1_b1"]),
        se1_w2=pw32(params["se1_w2"]), se1_b2=pb(params["se1_b2"]),
        conv2_w=pw16(params["conv2_w"]), conv2_b=pb(params["conv2_b"]),
        se2_w1=pw32(params["se2_w1"]), se2_b1=pb(params["se2_b1"]),
        se2_w2=pw32(params["se2_w2"]), se2_b2=pb(params["se2_b2"]),
        head_w=pw32(params["head_w"]), head_b=pb(params["head_b"]),
    )


# ---------------------------------------------------------------------------
# Single fused kernel: conv1 -> SE1 -> conv2 -> SE2 -> head
# ---------------------------------------------------------------------------
def _make_kernel(B, HW, BHW, BHW_p, Bp, C):
    def kernel(
        x_ref, pool_ref,
        c1w_ref, c1b_ref, s1w1_ref, s1b1_ref, s1w2_ref, s1b2_ref,
        c2w_ref, c2b_ref, s2w1_ref, s2b1_ref, s2w2_ref, s2b2_ref,
        hw_ref, hb_ref,
        pred_ref, attn1_ref, attn2_ref,
        xs_ref,
    ):
        f32 = jnp.float32
        bf16 = jnp.bfloat16

        def dot(a, b):
            return jnp.dot(a, b, preferred_element_type=f32)

        pool = pool_ref[...]                                   # (Bp, BHW_p) f32

        # Valid-region mask for the recorded excitation outputs (zero the padding).
        row_ok = jax.lax.broadcasted_iota(jnp.int32, (Bp, LANE), 0) < B
        col_ok = jax.lax.broadcasted_iota(jnp.int32, (Bp, LANE), 1) < C
        attn_mask = jnp.logical_and(row_ok, col_ok)

        # ---- conv1 (1x1 conv == pointwise channel matmul): bf16 MXU, f32 acc, ReLU
        x1 = jnp.maximum(dot(x_ref[...], c1w_ref[...]) + c1b_ref[...], 0.0)     # (BHW_p,128) f32

        # ---- SE block 1: squeeze (GAP over HW as a pool matmul) + excitation (f32 FCs)
        s1 = dot(pool, x1)                                                       # (Bp,128)
        h1 = jnp.maximum(dot(s1, s1w1_ref[...]) + s1b1_ref[...], 0.0)
        a1 = jnp.where(attn_mask, jax.nn.sigmoid(dot(h1, s1w2_ref[...]) + s1b2_ref[...]), 0.0)
        attn1_ref[...] = a1                       # hook on SE_Block.excitation (block 1)

        # ---- SE1 channel re-scale: per-batch sublane-broadcast VPU multiply into a
        #      bf16 staging buffer (replaces the old bcast matmul), feeding conv2's MXU.
        for b in range(B):
            lo = b * HW
            xs_ref[lo:lo + HW, :] = (x1[lo:lo + HW, :] * a1[b:b + 1, :]).astype(bf16)
        if BHW_p > BHW:
            xs_ref[BHW:, :] = jnp.zeros((BHW_p - BHW, LANE), bf16)

        # ---- conv2 + bias + ReLU (bf16 MXU, f32 acc)
        x2 = jnp.maximum(dot(xs_ref[...], c2w_ref[...]) + c2b_ref[...], 0.0)     # (BHW_p,128) f32

        # ---- SE block 2: squeeze + excitation
        s2 = dot(pool, x2)
        h2 = jnp.maximum(dot(s2, s2w1_ref[...]) + s2b1_ref[...], 0.0)
        a2 = jnp.where(attn_mask, jax.nn.sigmoid(dot(h2, s2w2_ref[...]) + s2b2_ref[...]), 0.0)
        attn2_ref[...] = a2                       # hook on SE_Block.excitation (block 2)

        # ---- classifier head.  The per-channel SE2 scale commutes with the spatial
        #      mean:  mean_hw(x2 * a2) == mean_hw(x2) * a2 == s2 * a2  — so no second
        #      full activation sweep is needed at all.
        p = s2 * a2                                                              # (Bp,128) f32
        pred_ref[...] = dot(p, hw_ref[...]) + hb_ref[...]

    return kernel


# ---------------------------------------------------------------------------
# SERecorder.forward equivalent: run the SE-CNN, collect excitation outputs,
# return (pred, attns).  `prepared` = prepare_params(params, img.shape).
# ---------------------------------------------------------------------------
def se_recorder_forward(img_nchw, prepared):
    B = prepared["B"]
    C_in = prepared["C_in"]
    HW = prepared["HW"]
    BHW = prepared["BHW"]
    BHW_p = prepared["BHW_p"]
    Bp = prepared["Bp"]
    C = prepared["C"]
    K = prepared["K"]

    # NCHW -> (B*HW, Cin) channels-last with spatial flattened; pad to lanes; bf16.
    x = jnp.transpose(img_nchw, (0, 2, 3, 1)).reshape(BHW, C_in)
    x = jnp.pad(x, ((0, BHW_p - BHW), (0, LANE - C_in))).astype(jnp.bfloat16)

    kernel = _make_kernel(B, HW, BHW, BHW_p, Bp, C)

    out_shapes = (
        jax.ShapeDtypeStruct((Bp, LANE), jnp.float32),   # pred  (padded)
        jax.ShapeDtypeStruct((Bp, LANE), jnp.float32),   # attn1 (padded)
        jax.ShapeDtypeStruct((Bp, LANE), jnp.float32),   # attn2 (padded)
    )

    # Single fused pallas_call: no grid, every operand is a full VMEM block (~0.5 MiB).
    pred_p, attn1_p, attn2_p = pl.pallas_call(
        kernel,
        out_shape=out_shapes,
        scratch_shapes=[pltpu.VMEM((BHW_p, LANE), jnp.bfloat16)],   # SE1-scaled x staging
        compiler_params=pltpu.CompilerParams(vmem_limit_bytes=32 * 1024 * 1024),
    )(x, prepared["pool"],
      prepared["conv1_w"], prepared["conv1_b"],
      prepared["se1_w1"], prepared["se1_b1"],
      prepared["se1_w2"], prepared["se1_b2"],
      prepared["conv2_w"], prepared["conv2_b"],
      prepared["se2_w1"], prepared["se2_b1"],
      prepared["se2_w2"], prepared["se2_b2"],
      prepared["head_w"], prepared["head_b"])

    pred = pred_p[:B, :K]
    recordings = [attn1_p[:B, :C], attn2_p[:B, :C]]
    attns = tuple(recordings) if len(recordings) > 0 else None
    return pred, attns


# ---------------------------------------------------------------------------
# Pure-JAX reference for correctness checking
# ---------------------------------------------------------------------------
def _ref_forward(img_nchw, params):
    B, C_in, H, W = img_nchw.shape
    x = jnp.transpose(img_nchw, (0, 2, 3, 1)).reshape(B, H * W, C_in)

    def conv(x, w, b):
        return jnp.maximum(jnp.einsum("bsc,cd->bsd", x, w) + b, 0.0)

    def se(x, w1, b1, w2, b2):
        s = jnp.mean(x, axis=1)
        h = jnp.maximum(s @ w1 + b1, 0.0)
        a = jax.nn.sigmoid(h @ w2 + b2)
        return x * a[:, None, :], a

    rec = []
    x = conv(x, params["conv1_w"], params["conv1_b"])
    x, a1 = se(x, params["se1_w1"], params["se1_b1"],
               params["se1_w2"], params["se1_b2"])
    rec.append(a1)
    x = conv(x, params["conv2_w"], params["conv2_b"])
    x, a2 = se(x, params["se2_w1"], params["se2_b1"],
               params["se2_w2"], params["se2_b2"])
    rec.append(a2)
    pred = jnp.mean(x, axis=1) @ params["head_w"] + params["head_b"]
    return pred, tuple(rec)


def _init_params(key, c_in=4, c=32, r=4, num_classes=10):
    ks = jax.random.split(key, 14)
    cr = c // r
    s = 0.1
    return {
        "conv1_w": s * jax.random.normal(ks[0], (c_in, c), jnp.float32),
        "conv1_b": s * jax.random.normal(ks[1], (1, c), jnp.float32),
        "se1_w1": s * jax.random.normal(ks[2], (c, cr), jnp.float32),
        "se1_b1": s * jax.random.normal(ks[3], (1, cr), jnp.float32),
        "se1_w2": s * jax.random.normal(ks[4], (cr, c), jnp.float32),
        "se1_b2": s * jax.random.normal(ks[5], (1, c), jnp.float32),
        "conv2_w": s * jax.random.normal(ks[6], (c, c), jnp.float32),
        "conv2_b": s * jax.random.normal(ks[7], (1, c), jnp.float32),
        "se2_w1": s * jax.random.normal(ks[8], (c, cr), jnp.float32),
        "se2_b1": s * jax.random.normal(ks[9], (1, cr), jnp.float32),
        "se2_w2": s * jax.random.normal(ks[10], (cr, c), jnp.float32),
        "se2_b2": s * jax.random.normal(ks[11], (1, c), jnp.float32),
        "head_w": s * jax.random.normal(ks[12], (c, num_classes), jnp.float32),
        "head_b": jnp.zeros((1, num_classes), jnp.float32),
    }


if __name__ == "__main__":
    key = jax.random.PRNGKey(0)
    k_img, k_par = jax.random.split(key)
    img = jax.random.normal(k_img, (2, 4, 16, 16), jnp.float32)   # NCHW
    params = _init_params(k_par)

    # Pad / cast weights and build the pooling constant ONCE (off the hot path).
    prepared = prepare_params(params, img.shape)
    fwd = jax.jit(functools.partial(se_recorder_forward, prepared=prepared))

    pred, attns = fwd(img)
    pred = jax.block_until_ready(pred)
    attns = jax.block_until_ready(attns)

    pred_ref, attns_ref = _ref_forward(img, params)
    assert pred.shape == (2, 10)
    assert attns is not None and len(attns) == 2
    assert all(a.shape == (2, 32) for a in attns)
    # Conv matmuls run in bf16 on the MXU -> loosen tolerances accordingly; the SE
    # excitation path stays f32 so recorded attns remain tight.
    assert jnp.allclose(pred, pred_ref, atol=2e-2, rtol=2e-2), \
        float(jnp.max(jnp.abs(pred - pred_ref)))
    for a, a_ref in zip(attns, attns_ref):
        assert jnp.allclose(a, a_ref, atol=1e-2, rtol=1e-2), \
            float(jnp.max(jnp.abs(a - a_ref)))

    print("KERNEL_OK")
</pallas_src>

<mosaic_0001>
module attributes {stable_mosaic.version = 11 : i64} {
  func.func @kernel(%arg0: memref<512x128xbf16, #tpu.memory_space<vmem>>, %arg1: memref<8x512xf32, #tpu.memory_space<vmem>>, %arg2: memref<128x128xbf16, #tpu.memory_space<vmem>>, %arg3: memref<1x128xf32, #tpu.memory_space<vmem>>, %arg4: memref<128x128xf32, #tpu.memory_space<vmem>>, %arg5: memref<1x128xf32, #tpu.memory_space<vmem>>, %arg6: memref<128x128xf32, #tpu.memory_space<vmem>>, %arg7: memref<1x128xf32, #tpu.memory_space<vmem>>, %arg8: memref<128x128xbf16, #tpu.memory_space<vmem>>, %arg9: memref<1x128xf32, #tpu.memory_space<vmem>>, %arg10: memref<128x128xf32, #tpu.memory_space<vmem>>, %arg11: memref<1x128xf32, #tpu.memory_space<vmem>>, %arg12: memref<128x128xf32, #tpu.memory_space<vmem>>, %arg13: memref<1x128xf32, #tpu.memory_space<vmem>>, %arg14: memref<128x128xf32, #tpu.memory_space<vmem>>, %arg15: memref<1x128xf32, #tpu.memory_space<vmem>>, %arg16: memref<8x128xf32, #tpu.memory_space<vmem>>, %arg17: memref<8x128xf32, #tpu.memory_space<vmem>>, %arg18: memref<8x128xf32, #tpu.memory_space<vmem>>, %arg19: memref<512x128xbf16, #tpu.memory_space<vmem>>) attributes {dimension_semantics = [], scalar_prefetch = 0 : i64, scratch_operands = 1 : i64, tpu.core_type = #tpu.core_type<tc>} {
    %c0 = arith.constant 0 : index
    %c0_0 = arith.constant 0 : index
    %0 = vector.load %arg1[%c0, %c0_0] : memref<8x512xf32, #tpu.memory_space<vmem>>, vector<8x512xf32>
    %1 = tpu.iota {dimensions = array<i32: 0>} : vector<8x128xi32>
    %c2_i32 = arith.constant 2 : i32
    %2 = vector.broadcast %c2_i32 : i32 to vector<8x128xi32>
    %3 = arith.cmpi slt, %1, %2 : vector<8x128xi32>
    %4 = tpu.iota {dimensions = array<i32: 1>} : vector<8x128xi32>
    %c32_i32 = arith.constant 32 : i32
    %5 = vector.broadcast %c32_i32 : i32 to vector<8x128xi32>
    %6 = arith.cmpi slt, %4, %5 : vector<8x128xi32>
    %7 = arith.andi %3, %6 : vector<8x128xi1>
    %c0_1 = arith.constant 0 : index
    %c0_2 = arith.constant 0 : index
    %8 = vector.load %arg0[%c0_1, %c0_2] : memref<512x128xbf16, #tpu.memory_space<vmem>>, vector<512x128xbf16>
    %c0_3 = arith.constant 0 : index
    %c0_4 = arith.constant 0 : index
    %9 = vector.load %arg2[%c0_3, %c0_4] : memref<128x128xbf16, #tpu.memory_space<vmem>>, vector<128x128xbf16>
    %cst = arith.constant dense<0.000000e+00> : vector<512x128xf32>
    %10 = tpu.matmul %8, %9, %cst {dimension_numbers = #tpu.dot_dimension_numbers<[1], [0], [0], [1], [0, 0, 1, 1], [], []>} : vector<512x128xbf16>, vector<128x128xbf16>, vector<512x128xf32> -> vector<512x128xf32>
    %c0_5 = arith.constant 0 : index
    %c0_6 = arith.constant 0 : index
    %11 = vector.load %arg3[%c0_5, %c0_6] : memref<1x128xf32, #tpu.memory_space<vmem>>, vector<1x128xf32>
    %12 = vector.broadcast %11 : vector<1x128xf32> to vector<512x128xf32>
    %13 = arith.addf %10, %12 : vector<512x128xf32>
    %cst_7 = arith.constant 0.000000e+00 : f32
    %14 = vector.broadcast %cst_7 : f32 to vector<512x128xf32>
    %15 = arith.maximumf %13, %14 : vector<512x128xf32>
    %cst_8 = arith.constant dense<0.000000e+00> : vector<8x128xf32>
    %16 = tpu.matmul %0, %15, %cst_8 {dimension_numbers = #tpu.dot_dimension_numbers<[1], [0], [0], [1], [0, 0, 1, 1], [], []>} : vector<8x512xf32>, vector<512x128xf32>, vector<8x128xf32> -> vector<8x128xf32>
    %c0_9 = arith.constant 0 : index
    %c0_10 = arith.constant 0 : index
    %17 = vector.load %arg4[%c0_9, %c0_10] : memref<128x128xf32, #tpu.memory_space<vmem>>, vector<128x128xf32>
    %cst_11 = arith.constant dense<0.000000e+00> : vector<8x128xf32>
    %18 = tpu.matmul %16, %17, %cst_11 {dimension_numbers = #tpu.dot_dimension_numbers<[1], [0], [0], [1], [0, 0, 1, 1], [], []>} : vector<8x128xf32>, vector<128x128xf32>, vector<8x128xf32> -> vector<8x128xf32>
    %c0_12 = arith.constant 0 : index
    %c0_13 = arith.constant 0 : index
    %19 = vector.load %arg5[%c0_12, %c0_13] : memref<1x128xf32, #tpu.memory_space<vmem>>, vector<1x128xf32>
    %20 = vector.broadcast %19 : vector<1x128xf32> to vector<8x128xf32>
    %21 = arith.addf %18, %20 : vector<8x128xf32>
    %cst_14 = arith.constant 0.000000e+00 : f32
    %22 = vector.broadcast %cst_14 : f32 to vector<8x128xf32>
    %23 = arith.maximumf %21, %22 : vector<8x128xf32>
    %c0_15 = arith.constant 0 : index
    %c0_16 = arith.constant 0 : index
    %24 = vector.load %arg6[%c0_15, %c0_16] : memref<128x128xf32, #tpu.memory_space<vmem>>, vector<128x128xf32>
    %cst_17 = arith.constant dense<0.000000e+00> : vector<8x128xf32>
    %25 = tpu.matmul %23, %24, %cst_17 {dimension_numbers = #tpu.dot_dimension_numbers<[1], [0], [0], [1], [0, 0, 1, 1], [], []>} : vector<8x128xf32>, vector<128x128xf32>, vector<8x128xf32> -> vector<8x128xf32>
    %c0_18 = arith.constant 0 : index
    %c0_19 = arith.constant 0 : index
    %26 = vector.load %arg7[%c0_18, %c0_19] : memref<1x128xf32, #tpu.memory_space<vmem>>, vector<1x128xf32>
    %27 = vector.broadcast %26 : vector<1x128xf32> to vector<8x128xf32>
    %28 = arith.addf %25, %27 : vector<8x128xf32>
    %29 = arith.negf %28 : vector<8x128xf32>
    %30 = math.exp %29 : vector<8x128xf32>
    %cst_20 = arith.constant 1.000000e+00 : f32
    %31 = vector.broadcast %cst_20 : f32 to vector<8x128xf32>
    %32 = arith.addf %31, %30 : vector<8x128xf32>
    %33 = arith.divf %31, %32 : vector<8x128xf32>
    %cst_21 = arith.constant 0.000000e+00 : f32
    %34 = vector.broadcast %cst_21 : f32 to vector<8x128xf32>
    %35 = arith.select %7, %33, %34 : vector<8x128xi1>, vector<8x128xf32>
    %c0_22 = arith.constant 0 : index
    %c0_23 = arith.constant 0 : index
    %36 = vector.load %arg17[%c0_22, %c0_23] : memref<8x128xf32, #tpu.memory_space<vmem>>, vector<8x128xf32>
    tpu.vector_store %arg17[%c0_22, %c0_23], %35 {strides = array<i32>} : memref<8x128xf32, #tpu.memory_space<vmem>>, vector<8x128xf32>,
    %37 = vector.extract_strided_slice %15 {offsets = [0, 0], sizes = [256, 128], strides = [1, 1]} : vector<512x128xf32> to vector<256x128xf32>
    %38 = vector.extract_strided_slice %35 {offsets = [0, 0], sizes = [1, 128], strides = [1, 1]} : vector<8x128xf32> to vector<1x128xf32>
    %39 = vector.broadcast %38 : vector<1x128xf32> to vector<256x128xf32>
    %40 = arith.mulf %37, %39 : vector<256x128xf32>
    %41 = arith.truncf %40 : vector<256x128xf32> to vector<256x128xbf16>
    %c0_24 = arith.constant 0 : index
    %c0_25 = arith.constant 0 : index
    %42 = vector.load %arg19[%c0_24, %c0_25] : memref<512x128xbf16, #tpu.memory_space<vmem>>, vector<256x128xbf16>
    tpu.vector_store %arg19[%c0_24, %c0_25], %41 {strides = array<i32>} : memref<512x128xbf16, #tpu.memory_space<vmem>>, vector<256x128xbf16>,
    %43 = vector.extract_strided_slice %15 {offsets = [256, 0], sizes = [256, 128], strides = [1, 1]} : vector<512x128xf32> to vector<256x128xf32>
    %44 = vector.extract_strided_slice %35 {offsets = [1, 0], sizes = [1, 128], strides = [1, 1]} : vector<8x128xf32> to vector<1x128xf32>
    %45 = vector.broadcast %44 : vector<1x128xf32> to vector<256x128xf32>
    %46 = arith.mulf %43, %45 : vector<256x128xf32>
    %47 = arith.truncf %46 : vector<256x128xf32> to vector<256x128xbf16>
    %c256 = arith.constant 256 : index
    %c0_26 = arith.constant 0 : index
    %48 = vector.load %arg19[%c256, %c0_26] : memref<512x128xbf16, #tpu.memory_space<vmem>>, vector<256x128xbf16>
    tpu.vector_store %arg19[%c256, %c0_26], %47 {strides = array<i32>} : memref<512x128xbf16, #tpu.memory_space<vmem>>, vector<256x128xbf16>,
    %c0_27 = arith.constant 0 : index
    %c0_28 = arith.constant 0 : index
    %49 = vector.load %arg19[%c0_27, %c0_28] : memref<512x128xbf16, #tpu.memory_space<vmem>>, vector<512x128xbf16>
    %c0_29 = arith.constant 0 : index
    %c0_30 = arith.constant 0 : index
    %50 = vector.load %arg8[%c0_29, %c0_30] : memref<128x128xbf16, #tpu.memory_space<vmem>>, vector<128x128xbf16>
    %cst_31 = arith.constant dense<0.000000e+00> : vector<512x128xf32>
    %51 = tpu.matmul %49, %50, %cst_31 {dimension_numbers = #tpu.dot_dimension_numbers<[1], [0], [0], [1], [0, 0, 1, 1], [], []>} : vector<512x128xbf16>, vector<128x128xbf16>, vector<512x128xf32> -> vector<512x128xf32>
    %c0_32 = arith.constant 0 : index
    %c0_33 = arith.constant 0 : index
    %52 = vector.load %arg9[%c0_32, %c0_33] : memref<1x128xf32, #tpu.memory_space<vmem>>, vector<1x128xf32>
    %53 = vector.broadcast %52 : vector<1x128xf32> to vector<512x128xf32>
    %54 = arith.addf %51, %53 : vector<512x128xf32>
    %cst_34 = arith.constant 0.000000e+00 : f32
    %55 = vector.broadcast %cst_34 : f32 to vector<512x128xf32>
    %56 = arith.maximumf %54, %55 : vector<512x128xf32>
    %cst_35 = arith.constant dense<0.000000e+00> : vector<8x128xf32>
    %57 = tpu.matmul %0, %56, %cst_35 {dimension_numbers = #tpu.dot_dimension_numbers<[1], [0], [0], [1], [0, 0, 1, 1], [], []>} : vector<8x512xf32>, vector<512x128xf32>, vector<8x128xf32> -> vector<8x128xf32>
    %c0_36 = arith.constant 0 : index
    %c0_37 = arith.constant 0 : index
    %58 = vector.load %arg10[%c0_36, %c0_37] : memref<128x128xf32, #tpu.memory_space<vmem>>, vector<128x128xf32>
    %cst_38 = arith.constant dense<0.000000e+00> : vector<8x128xf32>
    %59 = tpu.matmul %57, %58, %cst_38 {dimension_numbers = #tpu.dot_dimension_numbers<[1], [0], [0], [1], [0, 0, 1, 1], [], []>} : vector<8x128xf32>, vector<128x128xf32>, vector<8x128xf32> -> vector<8x128xf32>
    %c0_39 = arith.constant 0 : index
    %c0_40 = arith.constant 0 : index
    %60 = vector.load %arg11[%c0_39, %c0_40] : memref<1x128xf32, #tpu.memory_space<vmem>>, vector<1x128xf32>
    %61 = vector.broadcast %60 : vector<1x128xf32> to vector<8x128xf32>
    %62 = arith.addf %59, %61 : vector<8x128xf32>
    %cst_41 = arith.constant 0.000000e+00 : f32
    %63 = vector.broadcast %cst_41 : f32 to vector<8x128xf32>
    %64 = arith.maximumf %62, %63 : vector<8x128xf32>
    %c0_42 = arith.constant 0 : index
    %c0_43 = arith.constant 0 : index
    %65 = vector.load %arg12[%c0_42, %c0_43] : memref<128x128xf32, #tpu.memory_space<vmem>>, vector<128x128xf32>
    %cst_44 = arith.constant dense<0.000000e+00> : vector<8x128xf32>
    %66 = tpu.matmul %64, %65, %cst_44 {dimension_numbers = #tpu.dot_dimension_numbers<[1], [0], [0], [1], [0, 0, 1, 1], [], []>} : vector<8x128xf32>, vector<128x128xf32>, vector<8x128xf32> -> vector<8x128xf32>
    %c0_45 = arith.constant 0 : index
    %c0_46 = arith.constant 0 : index
    %67 = vector.load %arg13[%c0_45, %c0_46] : memref<1x128xf32, #tpu.memory_space<vmem>>, vector<1x128xf32>
    %68 = vector.broadcast %67 : vector<1x128xf32> to vector<8x128xf32>
    %69 = arith.addf %66, %68 : vector<8x128xf32>
    %70 = arith.negf %69 : vector<8x128xf32>
    %71 = math.exp %70 : vector<8x128xf32>
    %cst_47 = arith.constant 1.000000e+00 : f32
    %72 = vector.broadcast %cst_47 : f32 to vector<8x128xf32>
    %73 = arith.addf %72, %71 : vector<8x128xf32>
    %74 = arith.divf %72, %73 : vector<8x128xf32>
    %cst_48 = arith.constant 0.000000e+00 : f32
    %75 = vector.broadcast %cst_48 : f32 to vector<8x128xf32>
    %76 = arith.select %7, %74, %75 : vector<8x128xi1>, vector<8x128xf32>
    %c0_49 = arith.constant 0 : index
    %c0_50 = arith.constant 0 : index
    %77 = vector.load %arg18[%c0_49, %c0_50] : memref<8x128xf32, #tpu.memory_space<vmem>>, vector<8x128xf32>
    tpu.vector_store %arg18[%c0_49, %c0_50], %76 {strides = array<i32>} : memref<8x128xf32, #tpu.memory_space<vmem>>, vector<8x128xf32>,
    %78 = arith.mulf %57, %76 : vector<8x128xf32>
    %c0_51 = arith.constant 0 : index
    %c0_52 = arith.constant 0 : index
    %79 = vector.load %arg14[%c0_51, %c0_52] : memref<128x128xf32, #tpu.memory_space<vmem>>, vector<128x128xf32>
    %cst_53 = arith.constant dense<0.000000e+00> : vector<8x128xf32>
    %80 = tpu.matmul %78, %79, %cst_53 {dimension_numbers = #tpu.dot_dimension_numbers<[1], [0], [0], [1], [0, 0, 1, 1], [], []>} : vector<8x128xf32>, vector<128x128xf32>, vector<8x128xf32> -> vector<8x128xf32>
    %c0_54 = arith.constant 0 : index
    %c0_55 = arith.constant 0 : index
    %81 = vector.load %arg15[%c0_54, %c0_55] : memref<1x128xf32, #tpu.memory_space<vmem>>, vector<1x128xf32>
    %82 = vector.broadcast %81 : vector<1x128xf32> to vector<8x128xf32>
    %83 = arith.addf %80, %82 : vector<8x128xf32>
    %c0_56 = arith.constant 0 : index
    %c0_57 = arith.constant 0 : index
    %84 = vector.load %arg16[%c0_56, %c0_57] : memref<8x128xf32, #tpu.memory_space<vmem>>, vector<8x128xf32>
    tpu.vector_store %arg16[%c0_56, %c0_57], %83 {strides = array<i32>} : memref<8x128xf32, #tpu.memory_space<vmem>>, vector<8x128xf32>,
    return
  }
}

</mosaic_0001>

<llo_original>
// kernel: se_recorder_forward.1
$region0: #{se_recorder_forward.1}
  #allocation0 [shape = 'u32[]', space=smem, size = 0x4, offset = 0x4, fixed_abs, tag = 'smem constant byte address 0x4 - core index']
  #allocation1 [shape = 'u32[72,128]{1,0:T(1,128)}', space=vmem, size = 0x9000, scoped, tag = 'internal scratch']
  #allocation2 [shape = 'bf16[512,128]{1,0:T(8,128)(2,1)}', space=vmem, size = 0x20000, scoped, tag = 'scratch operand']
  %s0 = inlined_call_operand.vmem [shape: bf16[512,128], index: 0, kind: input, shape index: {}]
  %s1 = inlined_call_operand.vmem [shape: f32[8,512], index: 1, kind: input, shape index: {}]
  %s2 = inlined_call_operand.vmem [shape: bf16[128,128], index: 2, kind: input, shape index: {}]
  %s3 = inlined_call_operand.vmem [shape: f32[1,128], index: 3, kind: input, shape index: {}]
  %s4 = inlined_call_operand.vmem [shape: f32[128,128], index: 4, kind: input, shape index: {}]
  %s5 = inlined_call_operand.vmem [shape: f32[1,128], index: 5, kind: input, shape index: {}]
  %s6 = inlined_call_operand.vmem [shape: f32[128,128], index: 6, kind: input, shape index: {}]
  %s7 = inlined_call_operand.vmem [shape: f32[1,128], index: 7, kind: input, shape index: {}]
  %s8 = inlined_call_operand.vmem [shape: bf16[128,128], index: 8, kind: input, shape index: {}]
  %s9 = inlined_call_operand.vmem [shape: f32[1,128], index: 9, kind: input, shape index: {}]
  %s10 = inlined_call_operand.vmem [shape: f32[128,128], index: 10, kind: input, shape index: {}]
  %s11 = inlined_call_operand.vmem [shape: f32[1,128], index: 11, kind: input, shape index: {}]
  %s12 = inlined_call_operand.vmem [shape: f32[128,128], index: 12, kind: input, shape index: {}]
  %s13 = inlined_call_operand.vmem [shape: f32[1,128], index: 13, kind: input, shape index: {}]
  %s14 = inlined_call_operand.vmem [shape: f32[128,128], index: 14, kind: input, shape index: {}]
  %s15 = inlined_call_operand.vmem [shape: f32[1,128], index: 15, kind: input, shape index: {}]
  %s16 = inlined_call_operand.vmem [shape: f32[8,128], index: 16, kind: output, shape index: {0}]
  %s17 = inlined_call_operand.vmem [shape: f32[8,128], index: 17, kind: output, shape index: {1}]
  %s18 = inlined_call_operand.vmem [shape: f32[8,128], index: 18, kind: output, shape index: {2}]
  %19 = xla_tuple %s16, %s17, %s18
  %s20 = sld [smem:[#allocation0]]
  $region90: #{se_recorder_forward.1} parent=0
    _
  %s22 = ssub.s32 1, %s20
  %s23 = scalar_select 0, %s22, %s20
  // Predicated region
  $region2: #{se_recorder_forward.1} parent=0 // pred_check
    _
  $region3: #{se_recorder_forward.1} parent=0 // pred_check_branch
    %25 = sbr.rel (0) target = $region5
  $region4: #{se_recorder_forward.1} parent=0 // pred_region
    _
  $region5: #{se_recorder_forward.1} parent=0 // pred_fallthru
    _
  // Predicated region
  $region6: #{se_recorder_forward.1} parent=0 // pred_check
    _
  $region7: #{se_recorder_forward.1} parent=0 // pred_check_branch
    %27 = sbr.rel (0) target = $region9
  $region8: #{se_recorder_forward.1} parent=0 // pred_region
    _
  $region9: #{se_recorder_forward.1} parent=0 // pred_fallthru
    _
  // Predicated region
  $region10: #{se_recorder_forward.1} parent=0 // pred_check
    _
  $region11: #{se_recorder_forward.1} parent=0 // pred_check_branch
    %29 = sbr.rel (0) target = $region13
  $region12: #{se_recorder_forward.1} parent=0 // pred_region
    _
  $region13: #{se_recorder_forward.1} parent=0 // pred_fallthru
    _
  // Predicated region
  $region14: #{se_recorder_forward.1} parent=0 // pred_check
    _
  $region15: #{se_recorder_forward.1} parent=0 // pred_check_branch
    %31 = sbr.rel (0) target = $region17
  $region16: #{se_recorder_forward.1} parent=0 // pred_region
    _
  $region17: #{se_recorder_forward.1} parent=0 // pred_fallthru
    _
  // Predicated region
  $region18: #{se_recorder_forward.1} parent=0 // pred_check
    _
  $region19: #{se_recorder_forward.1} parent=0 // pred_check_branch
    %33 = sbr.rel (0) target = $region21
  $region20: #{se_recorder_forward.1} parent=0 // pred_region
    _
  $region21: #{se_recorder_forward.1} parent=0 // pred_fallthru
    _
  // Predicated region
  $region22: #{se_recorder_forward.1} parent=0 // pred_check
    _
  $region23: #{se_recorder_forward.1} parent=0 // pred_check_branch
    %35 = sbr.rel (0) target = $region25
  $region24: #{se_recorder_forward.1} parent=0 // pred_region
    _
  $region25: #{se_recorder_forward.1} parent=0 // pred_fallthru
    _
  // Predicated region
  $region26: #{se_recorder_forward.1} parent=0 // pred_check
    _
  $region27: #{se_recorder_forward.1} parent=0 // pred_check_branch
    %37 = sbr.rel (0) target = $region29
  $region28: #{se_recorder_forward.1} parent=0 // pred_region
    _
  $region29: #{se_recorder_forward.1} parent=0 // pred_fallthru
    _
  // Predicated region
  $region30: #{se_recorder_forward.1} parent=0 // pred_check
    _
  $region31: #{se_recorder_forward.1} parent=0 // pred_check_branch
    %39 = sbr.rel (0) target = $region33
  $region32: #{se_recorder_forward.1} parent=0 // pred_region
    _
  $region33: #{se_recorder_forward.1} parent=0 // pred_fallthru
    _
  // Predicated region
  $region34: #{se_recorder_forward.1} parent=0 // pred_check
    _
  $region35: #{se_recorder_forward.1} parent=0 // pred_check_branch
    %41 = sbr.rel (0) target = $region37
  $region36: #{se_recorder_forward.1} parent=0 // pred_region
    _
  $region37: #{se_recorder_forward.1} parent=0 // pred_fallthru
    _
  // Predicated region
  $region38: #{se_recorder_forward.1} parent=0 // pred_check
    _
  $region39: #{se_recorder_forward.1} parent=0 // pred_check_branch
    %43 = sbr.rel (0) target = $region41
  $region40: #{se_recorder_forward.1} parent=0 // pred_region
    _
  $region41: #{se_recorder_forward.1} parent=0 // pred_fallthru
    _
  // Predicated region
  $region42: #{se_recorder_forward.1} parent=0 // pred_check
    _
  $region43: #{se_recorder_forward.1} parent=0 // pred_check_branch
    %45 = sbr.rel (0) target = $region45
  $region44: #{se_recorder_forward.1} parent=0 // pred_region
    _
  $region45: #{se_recorder_forward.1} parent=0 // pred_fallthru
    _
  // Predicated region
  $region46: #{se_recorder_forward.1} parent=0 // pred_check
    _
  $region47: #{se_recorder_forward.1} parent=0 // pred_check_branch
    %47 = sbr.rel (0) target = $region49
  $region48: #{se_recorder_forward.1} parent=0 // pred_region
    _
  $region49: #{se_recorder_forward.1} parent=0 // pred_fallthru
    _
  // Predicated region
  $region50: #{se_recorder_forward.1} parent=0 // pred_check
    _
  $region51: #{se_recorder_forward.1} parent=0 // pred_check_branch
    %49 = sbr.rel (0) target = $region53
  $region52: #{se_recorder_forward.1} parent=0 // pred_region
    _
  $region53: #{se_recorder_forward.1} parent=0 // pred_fallthru
    _
  // Predicated region
  $region54: #{se_recorder_forward.1} parent=0 // pred_check
    _
  $region55: #{se_recorder_forward.1} parent=0 // pred_check_branch
    %51 = sbr.rel (0) target = $region57
  $region56: #{se_recorder_forward.1} parent=0 // pred_region
    _
  $region57: #{se_recorder_forward.1} parent=0 // pred_fallthru
    _
  // Predicated region
  $region58: #{se_recorder_forward.1} parent=0 // pred_check
    _
  $region59: #{se_recorder_forward.1} parent=0 // pred_check_branch
    %53 = sbr.rel (0) target = $region61
  $region60: #{se_recorder_forward.1} parent=0 // pred_region
    _
  $region61: #{se_recorder_forward.1} parent=0 // pred_fallthru
    _
  // Predicated region
  $region62: #{se_recorder_forward.1} parent=0 // pred_check
    _
  $region63: #{se_recorder_forward.1} parent=0 // pred_check_branch
    %55 = sbr.rel (0) target = $region65
  $region64: #{se_recorder_forward.1} parent=0 // pred_region
    _
  $region65: #{se_recorder_forward.1} parent=0 // pred_fallthru
    _
  %v56 = vld [vmem:[%s1] sm:$0xff]
  %v57 = vld [vmem:[%s1 + $0x8] sm:$0xff]
  %v58 = vld [vmem:[%s1 + $0x10] sm:$0xff]
  %v59 = vld [vmem:[%s1 + $0x18] sm:$0xff]
  %v60 = vlaneseq
  %v61 = vshrl.u32 %v60, 7
  %vm62 = vcmp.lt.s32.totalorder %v61, 2
  %v63 = vlaneseq
  %v64 = vand.u32 %v63, 127
  %vm65 = vcmp.lt.s32.totalorder %v64, 32
  %vm66 = vmand %vm62, %vm65
  %v67 = vld [vmem:[%s0] sm:$0xf]
  %v68 = vld [vmem:[%s0 + $0x4] sm:$0xf]
  %v69 = vld [vmem:[%s0 + $0x8] sm:$0xf]
  %v70 = vld [vmem:[%s0 + $0xc] sm:$0xf]
  %v71 = vld [vmem:[%s0 + $0x10] sm:$0xf]
  %v72 = vld [vmem:[%s0 + $0x14] sm:$0xf]
  %v73 = vld [vmem:[%s0 + $0x18] sm:$0xf]
  %v74 = vld [vmem:[%s0 + $0x1c] sm:$0xf]
  %v75 = vld [vmem:[%s0 + $0x20] sm:$0xf]
  %v76 = vld [vmem:[%s0 + $0x24] sm:$0xf]
  %v77 = vld [vmem:[%s0 + $0x28] sm:$0xf]
  %v78 = vld [vmem:[%s0 + $0x2c] sm:$0xf]
  %v79 = vld [vmem:[%s0 + $0x30] sm:$0xf]
  %v80 = vld [vmem:[%s0 + $0x34] sm:$0xf]
  %v81 = vld [vmem:[%s0 + $0x38] sm:$0xf]
  %v82 = vld [vmem:[%s0 + $0x3c] sm:$0xf]
  %v83 = vld [vmem:[%s0 + $0x40] sm:$0xf]
  %v84 = vld [vmem:[%s0 + $0x44] sm:$0xf]
  %v85 = vld [vmem:[%s0 + $0x48] sm:$0xf]
  %v86 = vld [vmem:[%s0 + $0x4c] sm:$0xf]
  %v87 = vld [vmem:[%s0 + $0x50] sm:$0xf]
  %v88 = vld [vmem:[%s0 + $0x54] sm:$0xf]
  %v89 = vld [vmem:[%s0 + $0x58] sm:$0xf]
  %v90 = vld [vmem:[%s0 + $0x5c] sm:$0xf]
  %v91 = vld [vmem:[%s0 + $0x60] sm:$0xf]
  %v92 = vld [vmem:[%s0 + $0x64] sm:$0xf]
  %v93 = vld [vmem:[%s0 + $0x68] sm:$0xf]
  %v94 = vld [vmem:[%s0 + $0x6c] sm:$0xf]
  %v95 = vld [vmem:[%s0 + $0x70] sm:$0xf]
  %v96 = vld [vmem:[%s0 + $0x74] sm:$0xf]
  %v97 = vld [vmem:[%s0 + $0x78] sm:$0xf]
  %v98 = vld [vmem:[%s0 + $0x7c] sm:$0xf]
  %v99 = vld [vmem:[%s0 + $0x80] sm:$0xf]
  %v100 = vld [vmem:[%s0 + $0x84] sm:$0xf]
  %v101 = vld [vmem:[%s0 + $0x88] sm:$0xf]
  %v102 = vld [vmem:[%s0 + $0x8c] sm:$0xf]
  %v103 = vld [vmem:[%s0 + $0x90] sm:$0xf]
  %v104 = vld [vmem:[%s0 + $0x94] sm:$0xf]
  %v105 = vld [vmem:[%s0 + $0x98] sm:$0xf]
  %v106 = vld [vmem:[%s0 + $0x9c] sm:$0xf]
  %v107 = vld [vmem:[%s0 + $0xa0] sm:$0xf]
  %v108 = vld [vmem:[%s0 + $0xa4] sm:$0xf]
  %v109 = vld [vmem:[%s0 + $0xa8] sm:$0xf]
  %v110 = vld [vmem:[%s0 + $0xac] sm:$0xf]
  %v111 = vld [vmem:[%s0 + $0xb0] sm:$0xf]
  %v112 = vld [vmem:[%s0 + $0xb4] sm:$0xf]
  %v113 = vld [vmem:[%s0 + $0xb8] sm:$0xf]
  %v114 = vld [vmem:[%s0 + $0xbc] sm:$0xf]
  %v115 = vld [vmem:[%s0 + $0xc0] sm:$0xf]
  %v116 = vld [vmem:[%s0 + $0xc4] sm:$0xf]
  %v117 = vld [vmem:[%s0 + $0xc8] sm:$0xf]
  %v118 = vld [vmem:[%s0 + $0xcc] sm:$0xf]
  %v119 = vld [vmem:[%s0 + $0xd0] sm:$0xf]
  %v120 = vld [vmem:[%s0 + $0xd4] sm:$0xf]
  %v121 = vld [vmem:[%s0 + $0xd8] sm:$0xf]
  %v122 = vld [vmem:[%s0 + $0xdc] sm:$0xf]
  %v123 = vld [vmem:[%s0 + $0xe0] sm:$0xf]
  %v124 = vld [vmem:[%s0 + $0xe4] sm:$0xf]
  %v125 = vld [vmem:[%s0 + $0xe8] sm:$0xf]
  %v126 = vld [vmem:[%s0 + $0xec] sm:$0xf]
  %v127 = vld [vmem:[%s0 + $0xf0] sm:$0xf]
  %v128 = vld [vmem:[%s0 + $0xf4] sm:$0xf]
  %v129 = vld [vmem:[%s0 + $0xf8] sm:$0xf]
  %v130 = vld [vmem:[%s0 + $0xfc] sm:$0xf]
  %v131 = vld [vmem:[%s2] sm:$0xf]
  %v132 = vld [vmem:[%s2 + $0x4] sm:$0xf]
  %v133 = vld [vmem:[%s2 + $0x8] sm:$0xf]
  %v134 = vld [vmem:[%s2 + $0xc] sm:$0xf]
  %v135 = vld [vmem:[%s2 + $0x10] sm:$0xf]
  %v136 = vld [vmem:[%s2 + $0x14] sm:$0xf]
  %v137 = vld [vmem:[%s2 + $0x18] sm:$0xf]
  %v138 = vld [vmem:[%s2 + $0x1c] sm:$0xf]
  %v139 = vld [vmem:[%s2 + $0x20] sm:$0xf]
  %v140 = vld [vmem:[%s2 + $0x24] sm:$0xf]
  %v141 = vld [vmem:[%s2 + $0x28] sm:$0xf]
  %v142 = vld [vmem:[%s2 + $0x2c] sm:$0xf]
  %v143 = vld [vmem:[%s2 + $0x30] sm:$0xf]
  %v144 = vld [vmem:[%s2 + $0x34] sm:$0xf]
  %v145 = vld [vmem:[%s2 + $0x38] sm:$0xf]
  %v146 = vld [vmem:[%s2 + $0x3c] sm:$0xf]
  %v147 = vld [vmem:[%s3] sm:$0x1]
  %v149 = vperm.slane %v147, 0
  %v215 = vunpack.c.l.b16 %v67
  %v216 = vunpack.c.l.b16 %v68
  %v217 = vunpack.c.l.b16 %v69
  %v218 = vunpack.c.l.b16 %v70
  %v219 = vunpack.c.l.b16 %v71
  %v220 = vunpack.c.l.b16 %v72
  %v221 = vunpack.c.l.b16 %v73
  %v222 = vunpack.c.l.b16 %v74
  %v223 = vunpack.c.l.b16 %v75
  %v224 = vunpack.c.l.b16 %v76
  %v225 = vunpack.c.l.b16 %v77
  %v226 = vunpack.c.l.b16 %v78
  %v227 = vunpack.c.l.b16 %v79
  %v228 = vunpack.c.l.b16 %v80
  %v229 = vunpack.c.l.b16 %v81
  %v230 = vunpack.c.l.b16 %v82
  %v231 = vunpack.c.l.b16 %v83
  %v232 = vunpack.c.l.b16 %v84
  %v233 = vunpack.c.l.b16 %v85
  %v234 = vunpack.c.l.b16 %v86
  %v235 = vunpack.c.l.b16 %v87
  %v236 = vunpack.c.l.b16 %v88
  %v237 = vunpack.c.l.b16 %v89
  %v238 = vunpack.c.l.b16 %v90
  %v239 = vunpack.c.l.b16 %v91
  %v240 = vunpack.c.l.b16 %v92
  %v241 = vunpack.c.l.b16 %v93
  %v242 = vunpack.c.l.b16 %v94
  %v243 = vunpack.c.l.b16 %v95
  %v244 = vunpack.c.l.b16 %v96
  %v245 = vunpack.c.l.b16 %v97
  %v246 = vunpack.c.l.b16 %v98
  %v247 = vunpack.c.l.b16 %v99
  %v248 = vunpack.c.l.b16 %v100
  %v249 = vunpack.c.l.b16 %v101
  %v250 = vunpack.c.l.b16 %v102
  %v251 = vunpack.c.l.b16 %v103
  %v252 = vunpack.c.l.b16 %v104
  %v253 = vunpack.c.l.b16 %v105
  %v254 = vunpack.c.l.b16 %v106
  %v255 = vunpack.c.l.b16 %v107
  %v256 = vunpack.c.l.b16 %v108
  %v257 = vunpack.c.l.b16 %v109
  %v258 = vunpack.c.l.b16 %v110
  %v259 = vunpack.c.l.b16 %v111
  %v260 = vunpack.c.l.b16 %v112
  %v261 = vunpack.c.l.b16 %v113
  %v262 = vunpack.c.l.b16 %v114
  %v263 = vunpack.c.l.b16 %v115
  %v264 = vunpack.c.l.b16 %v116
  %v265 = vunpack.c.l.b16 %v117
  %v266 = vunpack.c.l.b16 %v118
  %v267 = vunpack.c.l.b16 %v119
  %v268 = vunpack.c.l.b16 %v120
  %v269 = vunpack.c.l.b16 %v121
  %v270 = vunpack.c.l.b16 %v122
  %v271 = vunpack.c.l.b16 %v123
  %v272 = vunpack.c.l.b16 %v124
  %v273 = vunpack.c.l.b16 %v125
  %v274 = vunpack.c.l.b16 %v126
  %v275 = vunpack.c.l.b16 %v127
  %v276 = vunpack.c.l.b16 %v128
  %v277 = vunpack.c.l.b16 %v129
  %v278 = vunpack.c.l.b16 %v130
  %v279 = vpack.c.b16 %v216, %v215
  %v280 = vpack.c.b16 %v218, %v217
  %v281 = vpack.c.b16 %v220, %v219
  %v282 = vpack.c.b16 %v222, %v221
  %v283 = vpack.c.b16 %v224, %v223
  %v284 = vpack.c.b16 %v226, %v225
  %v285 = vpack.c.b16 %v228, %v227
  %v286 = vpack.c.b16 %v230, %v229
  %v287 = vpack.c.b16 %v232, %v231
  %v288 = vpack.c.b16 %v234, %v233
  %v289 = vpack.c.b16 %v236, %v235
  %v290 = vpack.c.b16 %v238, %v237
  %v291 = vpack.c.b16 %v240, %v239
  %v292 = vpack.c.b16 %v242, %v241
  %v293 = vpack.c.b16 %v244, %v243
  %v294 = vpack.c.b16 %v246, %v245
  %v295 = vpack.c.b16 %v248, %v247
  %v296 = vpack.c.b16 %v250, %v249
  %v297 = vpack.c.b16 %v252, %v251
  %v298 = vpack.c.b16 %v254, %v253
  %v299 = vpack.c.b16 %v256, %v255
  %v300 = vpack.c.b16 %v258, %v257
  %v301 = vpack.c.b16 %v260, %v259
  %v302 = vpack.c.b16 %v262, %v261
  %v303 = vpack.c.b16 %v264, %v263
  %v304 = vpack.c.b16 %v266, %v265
  %v305 = vpack.c.b16 %v268, %v267
  %v306 = vpack.c.b16 %v270, %v269
  %v307 = vpack.c.b16 %v272, %v271
  %v308 = vpack.c.b16 %v274, %v273
  %v309 = vpack.c.b16 %v276, %v275
  %v310 = vpack.c.b16 %v278, %v277
  %v359 = vunpack.c.l.b16 %v131
  %v360 = vunpack.c.l.b16 %v132
  %v361 = vunpack.c.l.b16 %v133
  %v362 = vunpack.c.l.b16 %v134
  %v363 = vunpack.c.l.b16 %v135
  %v364 = vunpack.c.l.b16 %v136
  %v365 = vunpack.c.l.b16 %v137
  %v366 = vunpack.c.l.b16 %v138
  %v367 = vunpack.c.l.b16 %v139
  %v368 = vunpack.c.l.b16 %v140
  %v369 = vunpack.c.l.b16 %v141
  %v370 = vunpack.c.l.b16 %v142
  %v371 = vunpack.c.l.b16 %v143
  %v372 = vunpack.c.l.b16 %v144
  %v373 = vunpack.c.l.b16 %v145
  %v374 = vunpack.c.l.b16 %v146
  %v375 = vpack.c.b16 %v360, %v359
  %v376 = vpack.c.b16 %v362, %v361
  %v377 = vpack.c.b16 %v364, %v363
  %v378 = vpack.c.b16 %v366, %v365
  %v379 = vpack.c.b16 %v368, %v367
  %v380 = vpack.c.b16 %v370, %v369
  %v381 = vpack.c.b16 %v372, %v371
  %v382 = vpack.c.b16 %v374, %v373
  %391 = vmatpush.bf16.msra.mxu0 %v382
  %392 = vmatpush.bf16.msra.mxu0 %v381
  %393 = vmatpush.bf16.msra.mxu0 %v380
  %394 = vmatpush.bf16.msra.mxu0 %v379
  %395 = vmatpush.bf16.msra.mxu0 %v378
  %396 = vmatpush.bf16.msra.mxu0 %v377
  %397 = vmatpush.bf16.msra.mxu0 %v376
  %398 = vmatpush.bf16.msra.mxu0 %v375
  %399 = vmatmul.bf16.gmra.mxu0 %v279
  %v400 = vpop.f32.mrf.mxu0
  %v401 = vadd.f32 %v149, %v400
  %v402 = vpop.f32.mrf.mxu0
  %v403 = vadd.f32 %v149, %v402
  %404 = vmatmul.bf16.gmra.mxu0 %v280
  %v405 = vpop.f32.mrf.mxu0
  %v406 = vadd.f32 %v149, %v405
  %v407 = vpop.f32.mrf.mxu0
  %v408 = vadd.f32 %v149, %v407
  %409 = vmatmul.bf16.gmra.mxu0 %v281
  %v410 = vpop.f32.mrf.mxu0
  %v411 = vadd.f32 %v149, %v410
  %v412 = vpop.f32.mrf.mxu0
  %v413 = vadd.f32 %v149, %v412
  %414 = vmatmul.bf16.gmra.mxu0 %v282
  %v415 = vpop.f32.mrf.mxu0
  %v416 = vadd.f32 %v149, %v415
  %v417 = vpop.f32.mrf.mxu0
  %v418 = vadd.f32 %v149, %v417
  %419 = vmatmul.bf16.gmra.mxu0 %v283
  %v420 = vpop.f32.mrf.mxu0
  %v421 = vadd.f32 %v149, %v420
  %v422 = vpop.f32.mrf.mxu0
  %v423 = vadd.f32 %v149, %v422
  %424 = vmatmul.bf16.gmra.mxu0 %v284
  %v425 = vpop.f32.mrf.mxu0
  %v426 = vadd.f32 %v149, %v425
  %v427 = vpop.f32.mrf.mxu0
  %v428 = vadd.f32 %v149, %v427
  %429 = vmatmul.bf16.gmra.mxu0 %v285
  %v430 = vpop.f32.mrf.mxu0
  %v431 = vadd.f32 %v149, %v430
  %v432 = vpop.f32.mrf.mxu0
  %v433 = vadd.f32 %v149, %v432
  %434 = vmatmul.bf16.gmra.mxu0 %v286
  %v435 = vpop.f32.mrf.mxu0
  %v436 = vadd.f32 %v149, %v435
  %v437 = vpop.f32.mrf.mxu0
  %v438 = vadd.f32 %v149, %v437
  %439 = vmatmul.bf16.gmra.mxu0 %v287
  %v440 = vpop.f32.mrf.mxu0
  %v441 = vadd.f32 %v149, %v440
  %v442 = vpop.f32.mrf.mxu0
  %v443 = vadd.f32 %v149, %v442
  %444 = vmatmul.bf16.gmra.mxu0 %v288
  %v445 = vpop.f32.mrf.mxu0
  %v446 = vadd.f32 %v149, %v445
  %v447 = vpop.f32.mrf.mxu0
  %v448 = vadd.f32 %v149, %v447
  %449 = vmatmul.bf16.gmra.mxu0 %v289
  %v450 = vpop.f32.mrf.mxu0
  %v451 = vadd.f32 %v149, %v450
  %v452 = vpop.f32.mrf.mxu0
  %v453 = vadd.f32 %v149, %v452
  %454 = vmatmul.bf16.gmra.mxu0 %v290
  %v455 = vpop.f32.mrf.mxu0
  %v456 = vadd.f32 %v149, %v455
  %v457 = vpop.f32.mrf.mxu0
  %v458 = vadd.f32 %v149, %v457
  %459 = vmatmul.bf16.gmra.mxu0 %v291
  %v460 = vpop.f32.mrf.mxu0
  %v461 = vadd.f32 %v149, %v460
  %v462 = vpop.f32.mrf.mxu0
  %v463 = vadd.f32 %v149, %v462
  %464 = vmatmul.bf16.gmra.mxu0 %v292
  %v465 = vpop.f32.mrf.mxu0
  %v466 = vadd.f32 %v149, %v465
  %v467 = vpop.f32.mrf.mxu0
  %v468 = vadd.f32 %v149, %v467
  %469 = vmatmul.bf16.gmra.mxu0 %v293
  %v470 = vpop.f32.mrf.mxu0
  %v471 = vadd.f32 %v149, %v470
  %v472 = vpop.f32.mrf.mxu0
  %v473 = vadd.f32 %v149, %v472
  %474 = vmatmul.bf16.gmra.mxu0 %v294
  %v475 = vpop.f32.mrf.mxu0
  %v476 = vadd.f32 %v149, %v475
  %v477 = vpop.f32.mrf.mxu0
  %v478 = vadd.f32 %v149, %v477
  %479 = vmatmul.bf16.gmra.mxu0 %v295
  %v480 = vpop.f32.mrf.mxu0
  %v481 = vadd.f32 %v149, %v480
  %v482 = vpop.f32.mrf.mxu0
  %v483 = vadd.f32 %v149, %v482
  %484 = vmatmul.bf16.gmra.mxu0 %v296
  %v485 = vpop.f32.mrf.mxu0
  %v486 = vadd.f32 %v149, %v485
  %v487 = vpop.f32.mrf.mxu0
  %v488 = vadd.f32 %v149, %v487
  %489 = vmatmul.bf16.gmra.mxu0 %v297
  %v490 = vpop.f32.mrf.mxu0
  %v491 = vadd.f32 %v149, %v490
  %v492 = vpop.f32.mrf.mxu0
  %v493 = vadd.f32 %v149, %v492
  %494 = vmatmul.bf16.gmra.mxu0 %v298
  %v495 = vpop.f32.mrf.mxu0
  %v496 = vadd.f32 %v149, %v495
  %v497 = vpop.f32.mrf.mxu0
  %v498 = vadd.f32 %v149, %v497
  %499 = vmatmul.bf16.gmra.mxu0 %v299
  %v500 = vpop.f32.mrf.mxu0
  %v501 = vadd.f32 %v149, %v500
  %v502 = vpop.f32.mrf.mxu0
  %v503 = vadd.f32 %v149, %v502
  %504 = vmatmul.bf16.gmra.mxu0 %v300
  %v505 = vpop.f32.mrf.mxu0
  %v506 = vadd.f32 %v149, %v505
  %v507 = vpop.f32.mrf.mxu0
  %v508 = vadd.f32 %v149, %v507
  %509 = vmatmul.bf16.gmra.mxu0 %v301
  %v510 = vpop.f32.mrf.mxu0
  %v511 = vadd.f32 %v149, %v510
  %v512 = vpop.f32.mrf.mxu0
  %v513 = vadd.f32 %v149, %v512
  %514 = vmatmul.bf16.gmra.mxu0 %v302
  %v515 = vpop.f32.mrf.mxu0
  %v516 = vadd.f32 %v149, %v515
  %v517 = vpop.f32.mrf.mxu0
  %v518 = vadd.f32 %v149, %v517
  %519 = vmatmul.bf16.gmra.mxu0 %v303
  %v520 = vpop.f32.mrf.mxu0
  %v521 = vadd.f32 %v149, %v520
  %v522 = vpop.f32.mrf.mxu0
  %v523 = vadd.f32 %v149, %v522
  %524 = vmatmul.bf16.gmra.mxu0 %v304
  %v525 = vpop.f32.mrf.mxu0
  %v526 = vadd.f32 %v149, %v525
  %v527 = vpop.f32.mrf.mxu0
  %v528 = vadd.f32 %v149, %v527
  %529 = vmatmul.bf16.gmra.mxu0 %v305
  %v530 = vpop.f32.mrf.mxu0
  %v531 = vadd.f32 %v149, %v530
  %v532 = vpop.f32.mrf.mxu0
  %v533 = vadd.f32 %v149, %v532
  %534 = vmatmul.bf16.gmra.mxu0 %v306
  %v535 = vpop.f32.mrf.mxu0
  %v536 = vadd.f32 %v149, %v535
  %v537 = vpop.f32.mrf.mxu0
  %v538 = vadd.f32 %v149, %v537
  %539 = vmatmul.bf16.gmra.mxu0 %v307
  %v540 = vpop.f32.mrf.mxu0
  %v541 = vadd.f32 %v149, %v540
  %v542 = vpop.f32.mrf.mxu0
  %v543 = vadd.f32 %v149, %v542
  %544 = vmatmul.bf16.gmra.mxu0 %v308
  %v545 = vpop.f32.mrf.mxu0
  %v546 = vadd.f32 %v149, %v545
  %v547 = vpop.f32.mrf.mxu0
  %v548 = vadd.f32 %v149, %v547
  %549 = vmatmul.bf16.gmra.mxu0 %v309
  %v550 = vpop.f32.mrf.mxu0
  %v551 = vadd.f32 %v149, %v550
  %v552 = vpop.f32.mrf.mxu0
  %v553 = vadd.f32 %v149, %v552
  %554 = vmatmul.bf16.gmra.mxu0 %v310
  %v555 = vpop.f32.mrf.mxu0
  %v556 = vadd.f32 %v149, %v555
  %v557 = vpop.f32.mrf.mxu0
  %v558 = vadd.f32 %v149, %v557
  %559 = vdwg.mxu0
  %v560 = vmax.f32 %v401, 0.0
  %v561 = vmax.f32 %v403, 0.0
  %v562 = vmax.f32 %v406, 0.0
  %v563 = vmax.f32 %v408, 0.0
  %v564 = vmax.f32 %v411, 0.0
  %v565 = vmax.f32 %v413, 0.0
  %v566 = vmax.f32 %v416, 0.0
  %v567 = vmax.f32 %v418, 0.0
  %v568 = vmax.f32 %v421, 0.0
  %v569 = vmax.f32 %v423, 0.0
  %v570 = vmax.f32 %v426, 0.0
  %v571 = vmax.f32 %v428, 0.0
  %v572 = vmax.f32 %v431, 0.0
  %v573 = vmax.f32 %v433, 0.0
  %v574 = vmax.f32 %v436, 0.0
  %v575 = vmax.f32 %v438, 0.0
  %v576 = vmax.f32 %v441, 0.0
  %v577 = vmax.f32 %v443, 0.0
  %v578 = vmax.f32 %v446, 0.0
  %v579 = vmax.f32 %v448, 0.0
  %v580 = vmax.f32 %v451, 0.0
  %v581 = vmax.f32 %v453, 0.0
  %v582 = vmax.f32 %v456, 0.0
  %v583 = vmax.f32 %v458, 0.0
  %v584 = vmax.f32 %v461, 0.0
  %v585 = vmax.f32 %v463, 0.0
  %v586 = vmax.f32 %v466, 0.0
  %v587 = vmax.f32 %v468, 0.0
  %v588 = vmax.f32 %v471, 0.0
  %v589 = vmax.f32 %v473, 0.0
  %v590 = vmax.f32 %v476, 0.0
  %v591 = vmax.f32 %v478, 0.0
  %v592 = vmax.f32 %v481, 0.0
  %v593 = vmax.f32 %v483, 0.0
  %v594 = vmax.f32 %v486, 0.0
  %v595 = vmax.f32 %v488, 0.0
  %v596 = vmax.f32 %v491, 0.0
  %v597 = vmax.f32 %v493, 0.0
  %v598 = vmax.f32 %v496, 0.0
  %v599 = vmax.f32 %v498, 0.0
  %v600 = vmax.f32 %v501, 0.0
  %v601 = vmax.f32 %v503, 0.0
  %v602 = vmax.f32 %v506, 0.0
  %v603 = vmax.f32 %v508, 0.0
  %v604 = vmax.f32 %v511, 0.0
  %v605 = vmax.f32 %v513, 0.0
  %v606 = vmax.f32 %v516, 0.0
  %v607 = vmax.f32 %v518, 0.0
  %v608 = vmax.f32 %v521, 0.0
  %v609 = vmax.f32 %v523, 0.0
  %v610 = vmax.f32 %v526, 0.0
  %v611 = vmax.f32 %v528, 0.0
  %v612 = vmax.f32 %v531, 0.0
  %v613 = vmax.f32 %v533, 0.0
  %v614 = vmax.f32 %v536, 0.0
  %v615 = vmax.f32 %v538, 0.0
  %v616 = vmax.f32 %v541, 0.0
  %v617 = vmax.f32 %v543, 0.0
  %v618 = vmax.f32 %v546, 0.0
  %v619 = vmax.f32 %v548, 0.0
  %v620 = vmax.f32 %v551, 0.0
  %v621 = vmax.f32 %v553, 0.0
  %v622 = vmax.f32 %v556, 0.0
  %v623 = vmax.f32 %v558, 0.0
  %624 = vmatpush.msra.mxu0 %v575
  %625 = vmatpush.msra.mxu0 %v574
  %626 = vmatpush.msra.mxu0 %v573
  %627 = vmatpush.msra.mxu0 %v572
  %628 = vmatpush.msra.mxu0 %v571
  %629 = vmatpush.msra.mxu0 %v570
  %630 = vmatpush.msra.mxu0 %v569
  %631 = vmatpush.msra.mxu0 %v568
  %632 = vmatpush.msra.mxu0 %v567
  %633 = vmatpush.msra.mxu0 %v566
  %634 = vmatpush.msra.mxu0 %v565
  %635 = vmatpush.msra.mxu0 %v564
  %636 = vmatpush.msra.mxu0 %v563
  %637 = vmatpush.msra.mxu0 %v562
  %638 = vmatpush.msra.mxu0 %v561
  %639 = vmatpush.msra.mxu0 %v560
  %640 = vmatmul.f32.gmra.mxu0 %v56
  %v641 = vpop.f32.mrf.mxu0
  %v642 = vadd.f32 0.0, %v641
  %643 = vdwg.mxu0
  %644 = vmatpush.msra.mxu0 %v591
  %645 = vmatpush.msra.mxu0 %v590
  %646 = vmatpush.msra.mxu0 %v589
  %647 = vmatpush.msra.mxu0 %v588
  %648 = vmatpush.msra.mxu0 %v587
  %649 = vmatpush.msra.mxu0 %v586
  %650 = vmatpush.msra.mxu0 %v585
  %651 = vmatpush.msra.mxu0 %v584
  %652 = vmatpush.msra.mxu0 %v583
  %653 = vmatpush.msra.mxu0 %v582
  %654 = vmatpush.msra.mxu0 %v581
  %655 = vmatpush.msra.mxu0 %v580
  %656 = vmatpush.msra.mxu0 %v579
  %657 = vmatpush.msra.mxu0 %v578
  %658 = vmatpush.msra.mxu0 %v577
  %659 = vmatpush.msra.mxu0 %v576
  %660 = vmatmul.f32.gmra.mxu0 %v57
  %v661 = vpop.f32.mrf.mxu0
  %v662 = vadd.f32 %v642, %v661
  %663 = vdwg.mxu0
  %664 = vmatpush.msra.mxu0 %v607
  %665 = vmatpush.msra.mxu0 %v606
  %666 = vmatpush.msra.mxu0 %v605
  %667 = vmatpush.msra.mxu0 %v604
  %668 = vmatpush.msra.mxu0 %v603
  %669 = vmatpush.msra.mxu0 %v602
  %670 = vmatpush.msra.mxu0 %v601
  %671 = vmatpush.msra.mxu0 %v600
  %672 = vmatpush.msra.mxu0 %v599
  %673 = vmatpush.msra.mxu0 %v598
  %674 = vmatpush.msra.mxu0 %v597
  %675 = vmatpush.msra.mxu0 %v596
  %676 = vmatpush.msra.mxu0 %v595
  %677 = vmatpush.msra.mxu0 %v594
  %678 = vmatpush.msra.mxu0 %v593
  %679 = vmatpush.msra.mxu0 %v592
  %680 = vmatmul.f32.gmra.mxu0 %v58
  %v681 = vpop.f32.mrf.mxu0
  %v682 = vadd.f32 %v662, %v681
  %683 = vdwg.mxu0
  %684 = vmatpush.msra.mxu0 %v623
  %685 = vmatpush.msra.mxu0 %v622
  %686 = vmatpush.msra.mxu0 %v621
  %687 = vmatpush.msra.mxu0 %v620
  %688 = vmatpush.msra.mxu0 %v619
  %689 = vmatpush.msra.mxu0 %v618
  %690 = vmatpush.msra.mxu0 %v617
  %691 = vmatpush.msra.mxu0 %v616
  %692 = vmatpush.msra.mxu0 %v615
  %693 = vmatpush.msra.mxu0 %v614
  %694 = vmatpush.msra.mxu0 %v613
  %695 = vmatpush.msra.mxu0 %v612
  %696 = vmatpush.msra.mxu0 %v611
  %697 = vmatpush.msra.mxu0 %v610
  %698 = vmatpush.msra.mxu0 %v609
  %699 = vmatpush.msra.mxu0 %v608
  %700 = vmatmul.f32.gmra.mxu0 %v59
  %v701 = vpop.f32.mrf.mxu0
  %v702 = vadd.f32 %v682, %v701
  %703 = vdwg.mxu0
  %v704 = vld [vmem:[%s4] sm:$0xff]
  %v705 = vld [vmem:[%s4 + $0x8] sm:$0xff]
  %v706 = vld [vmem:[%s4 + $0x10] sm:$0xff]
  %v707 = vld [vmem:[%s4 + $0x18] sm:$0xff]
  %v708 = vld [vmem:[%s4 + $0x20] sm:$0xff]
  %v709 = vld [vmem:[%s4 + $0x28] sm:$0xff]
  %v710 = vld [vmem:[%s4 + $0x30] sm:$0xff]
  %v711 = vld [vmem:[%s4 + $0x38] sm:$0xff]
  %v712 = vld [vmem:[%s4 + $0x40] sm:$0xff]
  %v713 = vld [vmem:[%s4 + $0x48] sm:$0xff]
  %v714 = vld [vmem:[%s4 + $0x50] sm:$0xff]
  %v715 = vld [vmem:[%s4 + $0x58] sm:$0xff]
  %v716 = vld [vmem:[%s4 + $0x60] sm:$0xff]
  %v717 = vld [vmem:[%s4 + $0x68] sm:$0xff]
  %v718 = vld [vmem:[%s4 + $0x70] sm:$0xff]
  %v719 = vld [vmem:[%s4 + $0x78] sm:$0xff]
  %v720 = vld [vmem:[%s5] sm:$0x1]
  %v722 = vperm.slane %v720, 0
  %724 = vmatpush.msra.mxu0 %v719
  %725 = vmatpush.msra.mxu0 %v718
  %726 = vmatpush.msra.mxu0 %v717
  %727 = vmatpush.msra.mxu0 %v716
  %728 = vmatpush.msra.mxu0 %v715
  %729 = vmatpush.msra.mxu0 %v714
  %730 = vmatpush.msra.mxu0 %v713
  %731 = vmatpush.msra.mxu0 %v712
  %732 = vmatpush.msra.mxu0 %v711
  %733 = vmatpush.msra.mxu0 %v710
  %734 = vmatpush.msra.mxu0 %v709
  %735 = vmatpush.msra.mxu0 %v708
  %736 = vmatpush.msra.mxu0 %v707
  %737 = vmatpush.msra.mxu0 %v706
  %738 = vmatpush.msra.mxu0 %v705
  %739 = vmatpush.msra.mxu0 %v704
  %740 = vmatmul.f32.gmra.mxu0 %v702
  %v741 = vpop.f32.mrf.mxu0
  %v742 = vadd.f32 %v722, %v741
  %743 = vdwg.mxu0
  %v744 = vmax.f32 %v742, 0.0
  %v745 = vld [vmem:[%s6] sm:$0xff]
  %v746 = vld [vmem:[%s6 + $0x8] sm:$0xff]
  %v747 = vld [vmem:[%s6 + $0x10] sm:$0xff]
  %v748 = vld [vmem:[%s6 + $0x18] sm:$0xff]
  %v749 = vld [vmem:[%s6 + $0x20] sm:$0xff]
  %v750 = vld [vmem:[%s6 + $0x28] sm:$0xff]
  %v751 = vld [vmem:[%s6 + $0x30] sm:$0xff]
  %v752 = vld [vmem:[%s6 + $0x38] sm:$0xff]
  %v753 = vld [vmem:[%s6 + $0x40] sm:$0xff]
  %v754 = vld [vmem:[%s6 + $0x48] sm:$0xff]
  %v755 = vld [vmem:[%s6 + $0x50] sm:$0xff]
  %v756 = vld [vmem:[%s6 + $0x58] sm:$0xff]
  %v757 = vld [vmem:[%s6 + $0x60] sm:$0xff]
  %v758 = vld [vmem:[%s6 + $0x68] sm:$0xff]
  %v759 = vld [vmem:[%s6 + $0x70] sm:$0xff]
  %v760 = vld [vmem:[%s6 + $0x78] sm:$0xff]
  %v761 = vld [vmem:[%s7] sm:$0x1]
  %v763 = vperm.slane %v761, 0
  %765 = vmatpush.msra.mxu0 %v760
  %766 = vmatpush.msra.mxu0 %v759
  %767 = vmatpush.msra.mxu0 %v758
  %768 = vmatpush.msra.mxu0 %v757
  %769 = vmatpush.msra.mxu0 %v756
  %770 = vmatpush.msra.mxu0 %v755
  %771 = vmatpush.msra.mxu0 %v754
  %772 = vmatpush.msra.mxu0 %v753
  %773 = vmatpush.msra.mxu0 %v752
  %774 = vmatpush.msra.mxu0 %v751
  %775 = vmatpush.msra.mxu0 %v750
  %776 = vmatpush.msra.mxu0 %v749
  %777 = vmatpush.msra.mxu0 %v748
  %778 = vmatpush.msra.mxu0 %v747
  %779 = vmatpush.msra.mxu0 %v746
  %780 = vmatpush.msra.mxu0 %v745
  %781 = vmatmul.f32.gmra.mxu0 %v744
  %v782 = vpop.f32.mrf.mxu0
  %v783 = vadd.f32 %v763, %v782
  %784 = vdwg.mxu0
  %v785 = vxor.u32 %v783, 2147483648
  %v786 = vmul.f32 %v785, 1.442695
  %v787 = vpow.pop %v786
  %v788 = vadd.f32 %v787, 1.0
  %v789 = vrcp.pop %v788
  %v790 = vmul.f32 %v788, %v789
  %v791 = vsub.f32 1.0, %v790
  %v792 = vmul.f32 %v789, %v791
  %v793 = vadd.f32 %v789, %v792
  %vm794 = vweird.f32 %v788
  %vm795 = vweird.f32 %v789
  %vm796 = vmor %vm794, %vm795
  %v797 = vsel %vm796, %v789, %v793
  %v798 = vand.u32 2147483647, %v788
  %vm799 = vcmp.eq.f32.partialorder %v798, 8.507059e+37
  %v800 = vand.u32 %v788, 2147483648
  %v801 = vor.u32 1.1754944e-38, %v800
  %v802 = vsel %vm799, %v801, %v797
  %v803 = vmul.f32 1.0, %v802
  %v804 = vsel %vm66, %v803, 0.0
  %805 = vst [vmem:[%s17] sm:$0xff] %v804
  %v806 = vperm.slane %v804, 0
  %v807 = vmul.f32 %v560, %v806
  %v808 = vmul.f32 %v561, %v806
  %v809 = vmul.f32 %v562, %v806
  %v810 = vmul.f32 %v563, %v806
  %v811 = vmul.f32 %v564, %v806
  %v812 = vmul.f32 %v565, %v806
  %v813 = vmul.f32 %v566, %v806
  %v814 = vmul.f32 %v567, %v806
  %v815 = vmul.f32 %v568, %v806
  %v816 = vmul.f32 %v569, %v806
  %v817 = vmul.f32 %v570, %v806
  %v818 = vmul.f32 %v571, %v806
  %v819 = vmul.f32 %v572, %v806
  %v820 = vmul.f32 %v573, %v806
  %v821 = vmul.f32 %v574, %v806
  %v822 = vmul.f32 %v575, %v806
  %v823 = vmul.f32 %v576, %v806
  %v824 = vmul.f32 %v577, %v806
  %v825 = vmul.f32 %v578, %v806
  %v826 = vmul.f32 %v579, %v806
  %v827 = vmul.f32 %v580, %v806
  %v828 = vmul.f32 %v581, %v806
  %v829 = vmul.f32 %v582, %v806
  %v830 = vmul.f32 %v583, %v806
  %v831 = vmul.f32 %v584, %v806
  %v832 = vmul.f32 %v585, %v806
  %v833 = vmul.f32 %v586, %v806
  %v834 = vmul.f32 %v587, %v806
  %v835 = vmul.f32 %v588, %v806
  %v836 = vmul.f32 %v589, %v806
  %v837 = vmul.f32 %v590, %v806
  %v838 = vmul.f32 %v591, %v806
  %v839 = vpack.c.bf16 %v807, %v807
  %v840 = vpack.c.bf16 %v808, %v808
  %v841 = vpack.c.bf16 %v809, %v809
  %v842 = vpack.c.bf16 %v810, %v810
  %v843 = vpack.c.bf16 %v811, %v811
  %v844 = vpack.c.bf16 %v812, %v812
  %v845 = vpack.c.bf16 %v813, %v813
  %v846 = vpack.c.bf16 %v814, %v814
  %v847 = vpack.c.bf16 %v815, %v815
  %v848 = vpack.c.bf16 %v816, %v816
  %v849 = vpack.c.bf16 %v817, %v817
  %v850 = vpack.c.bf16 %v818, %v818
  %v851 = vpack.c.bf16 %v819, %v819
  %v852 = vpack.c.bf16 %v820, %v820
  %v853 = vpack.c.bf16 %v821, %v821
  %v854 = vpack.c.bf16 %v822, %v822
  %v855 = vpack.c.bf16 %v823, %v823
  %v856 = vpack.c.bf16 %v824, %v824
  %v857 = vpack.c.bf16 %v825, %v825
  %v858 = vpack.c.bf16 %v826, %v826
  %v859 = vpack.c.bf16 %v827, %v827
  %v860 = vpack.c.bf16 %v828, %v828
  %v861 = vpack.c.bf16 %v829, %v829
  %v862 = vpack.c.bf16 %v830, %v830
  %v863 = vpack.c.bf16 %v831, %v831
  %v864 = vpack.c.bf16 %v832, %v832
  %v865 = vpack.c.bf16 %v833, %v833
  %v866 = vpack.c.bf16 %v834, %v834
  %v867 = vpack.c.bf16 %v835, %v835
  %v868 = vpack.c.bf16 %v836, %v836
  %v869 = vpack.c.bf16 %v837, %v837
  %v870 = vpack.c.bf16 %v838, %v838
  %871 = vst [vmem:[#allocation2] sm:$0xf] %v839
  %872 = vst [vmem:[#allocation2 + $0x4] sm:$0xf] %v840
  %873 = vst [vmem:[#allocation2 + $0x8] sm:$0xf] %v841
  %874 = vst [vmem:[#allocation2 + $0xc] sm:$0xf] %v842
  %875 = vst [vmem:[#allocation2 + $0x10] sm:$0xf] %v843
  %876 = vst [vmem:[#allocation2 + $0x14] sm:$0xf] %v844
  %877 = vst [vmem:[#allocation2 + $0x18] sm:$0xf] %v845
  %878 = vst [vmem:[#allocation2 + $0x1c] sm:$0xf] %v846
  %879 = vst [vmem:[#allocation2 + $0x20] sm:$0xf] %v847
  %880 = vst [vmem:[#allocation2 + $0x24] sm:$0xf] %v848
  %881 = vst [vmem:[#allocation2 + $0x28] sm:$0xf] %v849
  %882 = vst [vmem:[#allocation2 + $0x2c] sm:$0xf] %v850
  %883 = vst [vmem:[#allocation2 + $0x30] sm:$0xf] %v851
  %884 = vst [vmem:[#allocation2 + $0x34] sm:$0xf] %v852
  %885 = vst [vmem:[#allocation2 + $0x38] sm:$0xf] %v853
  %886 = vst [vmem:[#allocation2 + $0x3c] sm:$0xf] %v854
  %887 = vst [vmem:[#allocation2 + $0x40] sm:$0xf] %v855
  %888 = vst [vmem:[#allocation2 + $0x44] sm:$0xf] %v856
  %889 = vst [vmem:[#allocation2 + $0x48] sm:$0xf] %v857
  %890 = vst [vmem:[#allocation2 + $0x4c] sm:$0xf] %v858
  %891 = vst [vmem:[#allocation2 + $0x50] sm:$0xf] %v859
  %892 = vst [vmem:[#allocation2 + $0x54] sm:$0xf] %v860
  %893 = vst [vmem:[#allocation2 + $0x58] sm:$0xf] %v861
  %894 = vst [vmem:[#allocation2 + $0x5c] sm:$0xf] %v862
  %895 = vst [vmem:[#allocation2 + $0x60] sm:$0xf] %v863
  %896 = vst [vmem:[#allocation2 + $0x64] sm:$0xf] %v864
  %897 = vst [vmem:[#allocation2 + $0x68] sm:$0xf] %v865
  %898 = vst [vmem:[#allocation2 + $0x6c] sm:$0xf] %v866
  %899 = vst [vmem:[#allocation2 + $0x70] sm:$0xf] %v867
  %900 = vst [vmem:[#allocation2 + $0x74] sm:$0xf] %v868
  %901 = vst [vmem:[#allocation2 + $0x78] sm:$0xf] %v869
  %902 = vst [vmem:[#allocation2 + $0x7c] sm:$0xf] %v870
  %v903 = vperm.slane %v804, 1
  %v904 = vmul.f32 %v592, %v903
  %v905 = vmul.f32 %v593, %v903
  %v906 = vmul.f32 %v594, %v903
  %v907 = vmul.f32 %v595, %v903
  %v908 = vmul.f32 %v596, %v903
  %v909 = vmul.f32 %v597, %v903
  %v910 = vmul.f32 %v598, %v903
  %v911 = vmul.f32 %v599, %v903
  %v912 = vmul.f32 %v600, %v903
  %v913 = vmul.f32 %v601, %v903
  %v914 = vmul.f32 %v602, %v903
  %v915 = vmul.f32 %v603, %v903
  %v916 = vmul.f32 %v604, %v903
  %v917 = vmul.f32 %v605, %v903
  %v918 = vmul.f32 %v606, %v903
  %v919 = vmul.f32 %v607, %v903
  %v920 = vmul.f32 %v608, %v903
  %v921 = vmul.f32 %v609, %v903
  %v922 = vmul.f32 %v610, %v903
  %v923 = vmul.f32 %v611, %v903
  %v924 = vmul.f32 %v612, %v903
  %v925 = vmul.f32 %v613, %v903
  %v926 = vmul.f32 %v614, %v903
  %v927 = vmul.f32 %v615, %v903
  %v928 = vmul.f32 %v616, %v903
  %v929 = vmul.f32 %v617, %v903
  %v930 = vmul.f32 %v618, %v903
  %v931 = vmul.f32 %v619, %v903
  %v932 = vmul.f32 %v620, %v903
  %v933 = vmul.f32 %v621, %v903
  %v934 = vmul.f32 %v622, %v903
  %v935 = vmul.f32 %v623, %v903
  %v936 = vpack.c.bf16 %v904, %v904
  %v937 = vpack.c.bf16 %v905, %v905
  %v938 = vpack.c.bf16 %v906, %v906
  %v939 = vpack.c.bf16 %v907, %v907
  %v940 = vpack.c.bf16 %v908, %v908
  %v941 = vpack.c.bf16 %v909, %v909
  %v942 = vpack.c.bf16 %v910, %v910
  %v943 = vpack.c.bf16 %v911, %v911
  %v944 = vpack.c.bf16 %v912, %v912
  %v945 = vpack.c.bf16 %v913, %v913
  %v946 = vpack.c.bf16 %v914, %v914
  %v947 = vpack.c.bf16 %v915, %v915
  %v948 = vpack.c.bf16 %v916, %v916
  %v949 = vpack.c.bf16 %v917, %v917
  %v950 = vpack.c.bf16 %v918, %v918
  %v951 = vpack.c.bf16 %v919, %v919
  %v952 = vpack.c.bf16 %v920, %v920
  %v953 = vpack.c.bf16 %v921, %v921
  %v954 = vpack.c.bf16 %v922, %v922
  %v955 = vpack.c.bf16 %v923, %v923
  %v956 = vpack.c.bf16 %v924, %v924
  %v957 = vpack.c.bf16 %v925, %v925
  %v958 = vpack.c.bf16 %v926, %v926
  %v959 = vpack.c.bf16 %v927, %v927
  %v960 = vpack.c.bf16 %v928, %v928
  %v961 = vpack.c.bf16 %v929, %v929
  %v962 = vpack.c.bf16 %v930, %v930
  %v963 = vpack.c.bf16 %v931, %v931
  %v964 = vpack.c.bf16 %v932, %v932
  %v965 = vpack.c.bf16 %v933, %v933
  %v966 = vpack.c.bf16 %v934, %v934
  %v967 = vpack.c.bf16 %v935, %v935
  %968 = vst [vmem:[#allocation2 + $0x80] sm:$0xf] %v936
  %969 = vst [vmem:[#allocation2 + $0x84] sm:$0xf] %v937
  %970 = vst [vmem:[#allocation2 + $0x88] sm:$0xf] %v938
  %971 = vst [vmem:[#allocation2 + $0x8c] sm:$0xf] %v939
  %972 = vst [vmem:[#allocation2 + $0x90] sm:$0xf] %v940
  %973 = vst [vmem:[#allocation2 + $0x94] sm:$0xf] %v941
  %974 = vst [vmem:[#allocation2 + $0x98] sm:$0xf] %v942
  %975 = vst [vmem:[#allocation2 + $0x9c] sm:$0xf] %v943
  %976 = vst [vmem:[#allocation2 + $0xa0] sm:$0xf] %v944
  %977 = vst [vmem:[#allocation2 + $0xa4] sm:$0xf] %v945
  %978 = vst [vmem:[#allocation2 + $0xa8] sm:$0xf] %v946
  %979 = vst [vmem:[#allocation2 + $0xac] sm:$0xf] %v947
  %980 = vst [vmem:[#allocation2 + $0xb0] sm:$0xf] %v948
  %981 = vst [vmem:[#allocation2 + $0xb4] sm:$0xf] %v949
  %982 = vst [vmem:[#allocation2 + $0xb8] sm:$0xf] %v950
  %983 = vst [vmem:[#allocation2 + $0xbc] sm:$0xf] %v951
  %984 = vst [vmem:[#allocation2 + $0xc0] sm:$0xf] %v952
  %985 = vst [vmem:[#allocation2 + $0xc4] sm:$0xf] %v953
  %986 = vst [vmem:[#allocation2 + $0xc8] sm:$0xf] %v954
  %987 = vst [vmem:[#allocation2 + $0xcc] sm:$0xf] %v955
  %988 = vst [vmem:[#allocation2 + $0xd0] sm:$0xf] %v956
  %989 = vst [vmem:[#allocation2 + $0xd4] sm:$0xf] %v957
  %990 = vst [vmem:[#allocation2 + $0xd8] sm:$0xf] %v958
  %991 = vst [vmem:[#allocation2 + $0xdc] sm:$0xf] %v959
  %992 = vst [vmem:[#allocation2 + $0xe0] sm:$0xf] %v960
  %993 = vst [vmem:[#allocation2 + $0xe4] sm:$0xf] %v961
  %994 = vst [vmem:[#allocation2 + $0xe8] sm:$0xf] %v962
  %995 = vst [vmem:[#allocation2 + $0xec] sm:$0xf] %v963
  %996 = vst [vmem:[#allocation2 + $0xf0] sm:$0xf] %v964
  %997 = vst [vmem:[#allocation2 + $0xf4] sm:$0xf] %v965
  %998 = vst [vmem:[#allocation2 + $0xf8] sm:$0xf] %v966
  %999 = vst [vmem:[#allocation2 + $0xfc] sm:$0xf] %v967
  %v1000 = vld [vmem:[#allocation2] sm:$0xf]
  %v1001 = vld [vmem:[#allocation2 + $0x4] sm:$0xf]
  %v1002 = vld [vmem:[#allocation2 + $0x8] sm:$0xf]
  %v1003 = vld [vmem:[#allocation2 + $0xc] sm:$0xf]
  %v1004 = vld [vmem:[#allocation2 + $0x10] sm:$0xf]
  %v1005 = vld [vmem:[#allocation2 + $0x14] sm:$0xf]
  %v1006 = vld [vmem:[#allocation2 + $0x18] sm:$0xf]
  %v1007 = vld [vmem:[#allocation2 + $0x1c] sm:$0xf]
  %v1008 = vld [vmem:[#allocation2 + $0x20] sm:$0xf]
  %v1009 = vld [vmem:[#allocation2 + $0x24] sm:$0xf]
  %v1010 = vld [vmem:[#allocation2 + $0x28] sm:$0xf]
  %v1011 = vld [vmem:[#allocation2 + $0x2c] sm:$0xf]
  %v1012 = vld [vmem:[#allocation2 + $0x30] sm:$0xf]
  %v1013 = vld [vmem:[#allocation2 + $0x34] sm:$0xf]
  %v1014 = vld [vmem:[#allocation2 + $0x38] sm:$0xf]
  %v1015 = vld [vmem:[#allocation2 + $0x3c] sm:$0xf]
  %v1016 = vld [vmem:[#allocation2 + $0x40] sm:$0xf]
  %v1017 = vld [vmem:[#allocation2 + $0x44] sm:$0xf]
  %v1018 = vld [vmem:[#allocation2 + $0x48] sm:$0xf]
  %v1019 = vld [vmem:[#allocation2 + $0x4c] sm:$0xf]
  %v1020 = vld [vmem:[#allocation2 + $0x50] sm:$0xf]
  %v1021 = vld [vmem:[#allocation2 + $0x54] sm:$0xf]
  %v1022 = vld [vmem:[#allocation2 + $0x58] sm:$0xf]
  %v1023 = vld [vmem:[#allocation2 + $0x5c] sm:$0xf]
  %v1024 = vld [vmem:[#allocation2 + $0x60] sm:$0xf]
  %v1025 = vld [vmem:[#allocation2 + $0x64] sm:$0xf]
  %v1026 = vld [vmem:[#allocation2 + $0x68] sm:$0xf]
  %v1027 = vld [vmem:[#allocation2 + $0x6c] sm:$0xf]
  %v1028 = vld [vmem:[#allocation2 + $0x70] sm:$0xf]
  %v1029 = vld [vmem:[#allocation2 + $0x74] sm:$0xf]
  %v1030 = vld [vmem:[#allocation2 + $0x78] sm:$0xf]
  %v1031 = vld [vmem:[#allocation2 + $0x7c] sm:$0xf]
  %v1032 = vld [vmem:[#allocation2 + $0x80] sm:$0xf]
  %v1033 = vld [vmem:[#allocation2 + $0x84] sm:$0xf]
  %v1034 = vld [vmem:[#allocation2 + $0x88] sm:$0xf]
  %v1035 = vld [vmem:[#allocation2 + $0x8c] sm:$0xf]
  %v1036 = vld [vmem:[#allocation2 + $0x90] sm:$0xf]
  %v1037 = vld [vmem:[#allocation2 + $0x94] sm:$0xf]
  %v1038 = vld [vmem:[#allocation2 + $0x98] sm:$0xf]
  %v1039 = vld [vmem:[#allocation2 + $0x9c] sm:$0xf]
  %v1040 = vld [vmem:[#allocation2 + $0xa0] sm:$0xf]
  %v1041 = vld [vmem:[#allocation2 + $0xa4] sm:$0xf]
  %v1042 = vld [vmem:[#allocation2 + $0xa8] sm:$0xf]
  %v1043 = vld [vmem:[#allocation2 + $0xac] sm:$0xf]
  %v1044 = vld [vmem:[#allocation2 + $0xb0] sm:$0xf]
  %v1045 = vld [vmem:[#allocation2 + $0xb4] sm:$0xf]
  %v1046 = vld [vmem:[#allocation2 + $0xb8] sm:$0xf]
  %v1047 = vld [vmem:[#allocation2 + $0xbc] sm:$0xf]
  %v1048 = vld [vmem:[#allocation2 + $0xc0] sm:$0xf]
  %v1049 = vld [vmem:[#allocation2 + $0xc4] sm:$0xf]
  %v1050 = vld [vmem:[#allocation2 + $0xc8] sm:$0xf]
  %v1051 = vld [vmem:[#allocation2 + $0xcc] sm:$0xf]
  %v1052 = vld [vmem:[#allocation2 + $0xd0] sm:$0xf]
  %v1053 = vld [vmem:[#allocation2 + $0xd4] sm:$0xf]
  %v1054 = vld [vmem:[#allocation2 + $0xd8] sm:$0xf]
  %v1055 = vld [vmem:[#allocation2 + $0xdc] sm:$0xf]
  %v1056 = vld [vmem:[#allocation2 + $0xe0] sm:$0xf]
  %v1057 = vld [vmem:[#allocation2 + $0xe4] sm:$0xf]
  %v1058 = vld [vmem:[#allocation2 + $0xe8] sm:$0xf]
  %v1059 = vld [vmem:[#allocation2 + $0xec] sm:$0xf]
  %v1060 = vld [vmem:[#allocation2 + $0xf0] sm:$0xf]
  %v1061 = vld [vmem:[#allocation2 + $0xf4] sm:$0xf]
  %v1062 = vld [vmem:[#allocation2 + $0xf8] sm:$0xf]
  %v1063 = vld [vmem:[#allocation2 + $0xfc] sm:$0xf]
  %v1064 = vld [vmem:[%s8] sm:$0xf]
  %v1065 = vld [vmem:[%s8 + $0x4] sm:$0xf]
  %v1066 = vld [vmem:[%s8 + $0x8] sm:$0xf]
  %v1067 = vld [vmem:[%s8 + $0xc] sm:$0xf]
  %v1068 = vld [vmem:[%s8 + $0x10] sm:$0xf]
  %v1069 = vld [vmem:[%s8 + $0x14] sm:$0xf]
  %v1070 = vld [vmem:[%s8 + $0x18] sm:$0xf]
  %v1071 = vld [vmem:[%s8 + $0x1c] sm:$0xf]
  %v1072 = vld [vmem:[%s8 + $0x20] sm:$0xf]
  %v1073 = vld [vmem:[%s8 + $0x24] sm:$0xf]
  %v1074 = vld [vmem:[%s8 + $0x28] sm:$0xf]
  %v1075 = vld [vmem:[%s8 + $0x2c] sm:$0xf]
  %v1076 = vld [vmem:[%s8 + $0x30] sm:$0xf]
  %v1077 = vld [vmem:[%s8 + $0x34] sm:$0xf]
  %v1078 = vld [vmem:[%s8 + $0x38] sm:$0xf]
  %v1079 = vld [vmem:[%s8 + $0x3c] sm:$0xf]
  %v1080 = vld [vmem:[%s9] sm:$0x1]
  %v1082 = vperm.slane %v1080, 0
  %v1148 = vunpack.c.l.b16 %v1000
  %v1149 = vunpack.c.l.b16 %v1001
  %v1150 = vunpack.c.l.b16 %v1002
  %v1151 = vunpack.c.l.b16 %v1003
  %v1152 = vunpack.c.l.b16 %v1004
  %v1153 = vunpack.c.l.b16 %v1005
  %v1154 = vunpack.c.l.b16 %v1006
  %v1155 = vunpack.c.l.b16 %v1007
  %v1156 = vunpack.c.l.b16 %v1008
  %v1157 = vunpack.c.l.b16 %v1009
  %v1158 = vunpack.c.l.b16 %v1010
  %v1159 = vunpack.c.l.b16 %v1011
  %v1160 = vunpack.c.l.b16 %v1012
  %v1161 = vunpack.c.l.b16 %v1013
  %v1162 = vunpack.c.l.b16 %v1014
  %v1163 = vunpack.c.l.b16 %v1015
  %v1164 = vunpack.c.l.b16 %v1016
  %v1165 = vunpack.c.l.b16 %v1017
  %v1166 = vunpack.c.l.b16 %v1018
  %v1167 = vunpack.c.l.b16 %v1019
  %v1168 = vunpack.c.l.b16 %v1020
  %v1169 = vunpack.c.l.b16 %v1021
  %v1170 = vunpack.c.l.b16 %v1022
  %v1171 = vunpack.c.l.b16 %v1023
  %v1172 = vunpack.c.l.b16 %v1024
  %v1173 = vunpack.c.l.b16 %v1025
  %v1174 = vunpack.c.l.b16 %v1026
  %v1175 = vunpack.c.l.b16 %v1027
  %v1176 = vunpack.c.l.b16 %v1028
  %v1177 = vunpack.c.l.b16 %v1029
  %v1178 = vunpack.c.l.b16 %v1030
  %v1179 = vunpack.c.l.b16 %v1031
  %v1180 = vunpack.c.l.b16 %v1032
  %v1181 = vunpack.c.l.b16 %v1033
  %v1182 = vunpack.c.l.b16 %v1034
  %v1183 = vunpack.c.l.b16 %v1035
  %v1184 = vunpack.c.l.b16 %v1036
  %v1185 = vunpack.c.l.b16 %v1037
  %v1186 = vunpack.c.l.b16 %v1038
  %v1187 = vunpack.c.l.b16 %v1039
  %v1188 = vunpack.c.l.b16 %v1040
  %v1189 = vunpack.c.l.b16 %v1041
  %v1190 = vunpack.c.l.b16 %v1042
  %v1191 = vunpack.c.l.b16 %v1043
  %v1192 = vunpack.c.l.b16 %v1044
  %v1193 = vunpack.c.l.b16 %v1045
  %v1194 = vunpack.c.l.b16 %v1046
  %v1195 = vunpack.c.l.b16 %v1047
  %v1196 = vunpack.c.l.b16 %v1048
  %v1197 = vunpack.c.l.b16 %v1049
  %v1198 = vunpack.c.l.b16 %v1050
  %v1199 = vunpack.c.l.b16 %v1051
  %v1200 = vunpack.c.l.b16 %v1052
  %v1201 = vunpack.c.l.b16 %v1053
  %v1202 = vunpack.c.l.b16 %v1054
  %v1203 = vunpack.c.l.b16 %v1055
  %v1204 = vunpack.c.l.b16 %v1056
  %v1205 = vunpack.c.l.b16 %v1057
  %v1206 = vunpack.c.l.b16 %v1058
  %v1207 = vunpack.c.l.b16 %v1059
  %v1208 = vunpack.c.l.b16 %v1060
  %v1209 = vunpack.c.l.b16 %v1061
  %v1210 = vunpack.c.l.b16 %v1062
  %v1211 = vunpack.c.l.b16 %v1063
  %v1212 = vpack.c.b16 %v1149, %v1148
  %v1213 = vpack.c.b16 %v1151, %v1150
  %v1214 = vpack.c.b16 %v1153, %v1152
  %v1215 = vpack.c.b16 %v1155, %v1154
  %v1216 = vpack.c.b16 %v1157, %v1156
  %v1217 = vpack.c.b16 %v1159, %v1158
  %v1218 = vpack.c.b16 %v1161, %v1160
  %v1219 = vpack.c.b16 %v1163, %v1162
  %v1220 = vpack.c.b16 %v1165, %v1164
  %v1221 = vpack.c.b16 %v1167, %v1166
  %v1222 = vpack.c.b16 %v1169, %v1168
  %v1223 = vpack.c.b16 %v1171, %v1170
  %v1224 = vpack.c.b16 %v1173, %v1172
  %v1225 = vpack.c.b16 %v1175, %v1174
  %v1226 = vpack.c.b16 %v1177, %v1176
  %v1227 = vpack.c.b16 %v1179, %v1178
  %v1228 = vpack.c.b16 %v1181, %v1180
  %v1229 = vpack.c.b16 %v1183, %v1182
  %v1230 = vpack.c.b16 %v1185, %v1184
  %v1231 = vpack.c.b16 %v1187, %v1186
  %v1232 = vpack.c.b16 %v1189, %v1188
  %v1233 = vpack.c.b16 %v1191, %v1190
  %v1234 = vpack.c.b16 %v1193, %v1192
  %v1235 = vpack.c.b16 %v1195, %v1194
  %v1236 = vpack.c.b16 %v1197, %v1196
  %v1237 = vpack.c.b16 %v1199, %v1198
  %v1238 = vpack.c.b16 %v1201, %v1200
  %v1239 = vpack.c.b16 %v1203, %v1202
  %v1240 = vpack.c.b16 %v1205, %v1204
  %v1241 = vpack.c.b16 %v1207, %v1206
  %v1242 = vpack.c.b16 %v1209, %v1208
  %v1243 = vpack.c.b16 %v1211, %v1210
  %v1292 = vunpack.c.l.b16 %v1064
  %v1293 = vunpack.c.l.b16 %v1065
  %v1294 = vunpack.c.l.b16 %v1066
  %v1295 = vunpack.c.l.b16 %v1067
  %v1296 = vunpack.c.l.b16 %v1068
  %v1297 = vunpack.c.l.b16 %v1069
  %v1298 = vunpack.c.l.b16 %v1070
  %v1299 = vunpack.c.l.b16 %v1071
  %v1300 = vunpack.c.l.b16 %v1072
  %v1301 = vunpack.c.l.b16 %v1073
  %v1302 = vunpack.c.l.b16 %v1074
  %v1303 = vunpack.c.l.b16 %v1075
  %v1304 = vunpack.c.l.b16 %v1076
  %v1305 = vunpack.c.l.b16 %v1077
  %v1306 = vunpack.c.l.b16 %v1078
  %v1307 = vunpack.c.l.b16 %v1079
  %v1308 = vpack.c.b16 %v1293, %v1292
  %v1309 = vpack.c.b16 %v1295, %v1294
  %v1310 = vpack.c.b16 %v1297, %v1296
  %v1311 = vpack.c.b16 %v1299, %v1298
  %v1312 = vpack.c.b16 %v1301, %v1300
  %v1313 = vpack.c.b16 %v1303, %v1302
  %v1314 = vpack.c.b16 %v1305, %v1304
  %v1315 = vpack.c.b16 %v1307, %v1306
  %1324 = vmatpush.bf16.msra.mxu0 %v1315
  %1325 = vmatpush.bf16.msra.mxu0 %v1314
  %1326 = vmatpush.bf16.msra.mxu0 %v1313
  %1327 = vmatpush.bf16.msra.mxu0 %v1312
  %1328 = vmatpush.bf16.msra.mxu0 %v1311
  %1329 = vmatpush.bf16.msra.mxu0 %v1310
  %1330 = vmatpush.bf16.msra.mxu0 %v1309
  %1331 = vmatpush.bf16.msra.mxu0 %v1308
  %1332 = vmatmul.bf16.gmra.mxu0 %v1212
  %v1333 = vpop.f32.mrf.mxu0
  %v1334 = vadd.f32 %v1082, %v1333
  %v1335 = vpop.f32.mrf.mxu0
  %v1336 = vadd.f32 %v1082, %v1335
  %1337 = vmatmul.bf16.gmra.mxu0 %v1213
  %v1338 = vpop.f32.mrf.mxu0
  %v1339 = vadd.f32 %v1082, %v1338
  %v1340 = vpop.f32.mrf.mxu0
  %v1341 = vadd.f32 %v1082, %v1340
  %1342 = vmatmul.bf16.gmra.mxu0 %v1214
  %v1343 = vpop.f32.mrf.mxu0
  %v1344 = vadd.f32 %v1082, %v1343
  %v1345 = vpop.f32.mrf.mxu0
  %v1346 = vadd.f32 %v1082, %v1345
  %1347 = vmatmul.bf16.gmra.mxu0 %v1215
  %v1348 = vpop.f32.mrf.mxu0
  %v1349 = vadd.f32 %v1082, %v1348
  %v1350 = vpop.f32.mrf.mxu0
  %v1351 = vadd.f32 %v1082, %v1350
  %1352 = vmatmul.bf16.gmra.mxu0 %v1216
  %v1353 = vpop.f32.mrf.mxu0
  %v1354 = vadd.f32 %v1082, %v1353
  %v1355 = vpop.f32.mrf.mxu0
  %v1356 = vadd.f32 %v1082, %v1355
  %1357 = vmatmul.bf16.gmra.mxu0 %v1217
  %v1358 = vpop.f32.mrf.mxu0
  %v1359 = vadd.f32 %v1082, %v1358
  %v1360 = vpop.f32.mrf.mxu0
  %v1361 = vadd.f32 %v1082, %v1360
  %1362 = vmatmul.bf16.gmra.mxu0 %v1218
  %v1363 = vpop.f32.mrf.mxu0
  %v1364 = vadd.f32 %v1082, %v1363
  %v1365 = vpop.f32.mrf.mxu0
  %v1366 = vadd.f32 %v1082, %v1365
  %1367 = vmatmul.bf16.gmra.mxu0 %v1219
  %v1368 = vpop.f32.mrf.mxu0
  %v1369 = vadd.f32 %v1082, %v1368
  %v1370 = vpop.f32.mrf.mxu0
  %v1371 = vadd.f32 %v1082, %v1370
  %1372 = vmatmul.bf16.gmra.mxu0 %v1220
  %v1373 = vpop.f32.mrf.mxu0
  %v1374 = vadd.f32 %v1082, %v1373
  %v1375 = vpop.f32.mrf.mxu0
  %v1376 = vadd.f32 %v1082, %v1375
  %1377 = vmatmul.bf16.gmra.mxu0 %v1221
  %v1378 = vpop.f32.mrf.mxu0
  %v1379 = vadd.f32 %v1082, %v1378
  %v1380 = vpop.f32.mrf.mxu0
  %v1381 = vadd.f32 %v1082, %v1380
  %1382 = vmatmul.bf16.gmra.mxu0 %v1222
  %v1383 = vpop.f32.mrf.mxu0
  %v1384 = vadd.f32 %v1082, %v1383
  %v1385 = vpop.f32.mrf.mxu0
  %v1386 = vadd.f32 %v1082, %v1385
  %1387 = vmatmul.bf16.gmra.mxu0 %v1223
  %v1388 = vpop.f32.mrf.mxu0
  %v1389 = vadd.f32 %v1082, %v1388
  %v1390 = vpop.f32.mrf.mxu0
  %v1391 = vadd.f32 %v1082, %v1390
  %1392 = vmatmul.bf16.gmra.mxu0 %v1224
  %v1393 = vpop.f32.mrf.mxu0
  %v1394 = vadd.f32 %v1082, %v1393
  %v1395 = vpop.f32.mrf.mxu0
  %v1396 = vadd.f32 %v1082, %v1395
  %1397 = vmatmul.bf16.gmra.mxu0 %v1225
  %v1398 = vpop.f32.mrf.mxu0
  %v1399 = vadd.f32 %v1082, %v1398
  %v1400 = vpop.f32.mrf.mxu0
  %v1401 = vadd.f32 %v1082, %v1400
  %1402 = vmatmul.bf16.gmra.mxu0 %v1226
  %v1403 = vpop.f32.mrf.mxu0
  %v1404 = vadd.f32 %v1082, %v1403
  %v1405 = vpop.f32.mrf.mxu0
  %v1406 = vadd.f32 %v1082, %v1405
  %1407 = vmatmul.bf16.gmra.mxu0 %v1227
  %v1408 = vpop.f32.mrf.mxu0
  %v1409 = vadd.f32 %v1082, %v1408
  %v1410 = vpop.f32.mrf.mxu0
  %v1411 = vadd.f32 %v1082, %v1410
  %1412 = vmatmul.bf16.gmra.mxu0 %v1228
  %v1413 = vpop.f32.mrf.mxu0
  %v1414 = vadd.f32 %v1082, %v1413
  %v1415 = vpop.f32.mrf.mxu0
  %v1416 = vadd.f32 %v1082, %v1415
  %1417 = vmatmul.bf16.gmra.mxu0 %v1229
  %v1418 = vpop.f32.mrf.mxu0
  %v1419 = vadd.f32 %v1082, %v1418
  %v1420 = vpop.f32.mrf.mxu0
  %v1421 = vadd.f32 %v1082, %v1420
  %1422 = vmatmul.bf16.gmra.mxu0 %v1230
  %v1423 = vpop.f32.mrf.mxu0
  %v1424 = vadd.f32 %v1082, %v1423
  %v1425 = vpop.f32.mrf.mxu0
  %v1426 = vadd.f32 %v1082, %v1425
  %1427 = vmatmul.bf16.gmra.mxu0 %v1231
  %v1428 = vpop.f32.mrf.mxu0
  %v1429 = vadd.f32 %v1082, %v1428
  %v1430 = vpop.f32.mrf.mxu0
  %v1431 = vadd.f32 %v1082, %v1430
  %1432 = vmatmul.bf16.gmra.mxu0 %v1232
  %v1433 = vpop.f32.mrf.mxu0
  %v1434 = vadd.f32 %v1082, %v1433
  %v1435 = vpop.f32.mrf.mxu0
  %v1436 = vadd.f32 %v1082, %v1435
  %1437 = vmatmul.bf16.gmra.mxu0 %v1233
  %v1438 = vpop.f32.mrf.mxu0
  %v1439 = vadd.f32 %v1082, %v1438
  %v1440 = vpop.f32.mrf.mxu0
  %v1441 = vadd.f32 %v1082, %v1440
  %1442 = vmatmul.bf16.gmra.mxu0 %v1234
  %v1443 = vpop.f32.mrf.mxu0
  %v1444 = vadd.f32 %v1082, %v1443
  %v1445 = vpop.f32.mrf.mxu0
  %v1446 = vadd.f32 %v1082, %v1445
  %1447 = vmatmul.bf16.gmra.mxu0 %v1235
  %v1448 = vpop.f32.mrf.mxu0
  %v1449 = vadd.f32 %v1082, %v1448
  %v1450 = vpop.f32.mrf.mxu0
  %v1451 = vadd.f32 %v1082, %v1450
  %1452 = vmatmul.bf16.gmra.mxu0 %v1236
  %v1453 = vpop.f32.mrf.mxu0
  %v1454 = vadd.f32 %v1082, %v1453
  %v1455 = vpop.f32.mrf.mxu0
  %v1456 = vadd.f32 %v1082, %v1455
  %1457 = vmatmul.bf16.gmra.mxu0 %v1237
  %v1458 = vpop.f32.mrf.mxu0
  %v1459 = vadd.f32 %v1082, %v1458
  %v1460 = vpop.f32.mrf.mxu0
  %v1461 = vadd.f32 %v1082, %v1460
  %1462 = vmatmul.bf16.gmra.mxu0 %v1238
  %v1463 = vpop.f32.mrf.mxu0
  %v1464 = vadd.f32 %v1082, %v1463
  %v1465 = vpop.f32.mrf.mxu0
  %v1466 = vadd.f32 %v1082, %v1465
  %1467 = vmatmul.bf16.gmra.mxu0 %v1239
  %v1468 = vpop.f32.mrf.mxu0
  %v1469 = vadd.f32 %v1082, %v1468
  %v1470 = vpop.f32.mrf.mxu0
  %v1471 = vadd.f32 %v1082, %v1470
  %1472 = vmatmul.bf16.gmra.mxu0 %v1240
  %v1473 = vpop.f32.mrf.mxu0
  %v1474 = vadd.f32 %v1082, %v1473
  %v1475 = vpop.f32.mrf.mxu0
  %v1476 = vadd.f32 %v1082, %v1475
  %1477 = vmatmul.bf16.gmra.mxu0 %v1241
  %v1478 = vpop.f32.mrf.mxu0
  %v1479 = vadd.f32 %v1082, %v1478
  %v1480 = vpop.f32.mrf.mxu0
  %v1481 = vadd.f32 %v1082, %v1480
  %1482 = vmatmul.bf16.gmra.mxu0 %v1242
  %v1483 = vpop.f32.mrf.mxu0
  %v1484 = vadd.f32 %v1082, %v1483
  %v1485 = vpop.f32.mrf.mxu0
  %v1486 = vadd.f32 %v1082, %v1485
  %1487 = vmatmul.bf16.gmra.mxu0 %v1243
  %v1488 = vpop.f32.mrf.mxu0
  %v1489 = vadd.f32 %v1082, %v1488
  %v1490 = vpop.f32.mrf.mxu0
  %v1491 = vadd.f32 %v1082, %v1490
  %1492 = vdwg.mxu0
  %v1493 = vmax.f32 %v1334, 0.0
  %v1494 = vmax.f32 %v1336, 0.0
  %v1495 = vmax.f32 %v1339, 0.0
  %v1496 = vmax.f32 %v1341, 0.0
  %v1497 = vmax.f32 %v1344, 0.0
  %v1498 = vmax.f32 %v1346, 0.0
  %v1499 = vmax.f32 %v1349, 0.0
  %v1500 = vmax.f32 %v1351, 0.0
  %v1501 = vmax.f32 %v1354, 0.0
  %v1502 = vmax.f32 %v1356, 0.0
  %v1503 = vmax.f32 %v1359, 0.0
  %v1504 = vmax.f32 %v1361, 0.0
  %v1505 = vmax.f32 %v1364, 0.0
  %v1506 = vmax.f32 %v1366, 0.0
  %v1507 = vmax.f32 %v1369, 0.0
  %v1508 = vmax.f32 %v1371, 0.0
  %v1509 = vmax.f32 %v1374, 0.0
  %v1510 = vmax.f32 %v1376, 0.0
  %v1511 = vmax.f32 %v1379, 0.0
  %v1512 = vmax.f32 %v1381, 0.0
  %v1513 = vmax.f32 %v1384, 0.0
  %v1514 = vmax.f32 %v1386, 0.0
  %v1515 = vmax.f32 %v1389, 0.0
  %v1516 = vmax.f32 %v1391, 0.0
  %v1517 = vmax.f32 %v1394, 0.0
  %v1518 = vmax.f32 %v1396, 0.0
  %v1519 = vmax.f32 %v1399, 0.0
  %v1520 = vmax.f32 %v1401, 0.0
  %v1521 = vmax.f32 %v1404, 0.0
  %v1522 = vmax.f32 %v1406, 0.0
  %v1523 = vmax.f32 %v1409, 0.0
  %v1524 = vmax.f32 %v1411, 0.0
  %v1525 = vmax.f32 %v1414, 0.0
  %v1526 = vmax.f32 %v1416, 0.0
  %v1527 = vmax.f32 %v1419, 0.0
  %v1528 = vmax.f32 %v1421, 0.0
  %v1529 = vmax.f32 %v1424, 0.0
  %v1530 = vmax.f32 %v1426, 0.0
  %v1531 = vmax.f32 %v1429, 0.0
  %v1532 = vmax.f32 %v1431, 0.0
  %v1533 = vmax.f32 %v1434, 0.0
  %v1534 = vmax.f32 %v1436, 0.0
  %v1535 = vmax.f32 %v1439, 0.0
  %v1536 = vmax.f32 %v1441, 0.0
  %v1537 = vmax.f32 %v1444, 0.0
  %v1538 = vmax.f32 %v1446, 0.0
  %v1539 = vmax.f32 %v1449, 0.0
  %v1540 = vmax.f32 %v1451, 0.0
  %v1541 = vmax.f32 %v1454, 0.0
  %v1542 = vmax.f32 %v1456, 0.0
  %v1543 = vmax.f32 %v1459, 0.0
  %v1544 = vmax.f32 %v1461, 0.0
  %v1545 = vmax.f32 %v1464, 0.0
  %v1546 = vmax.f32 %v1466, 0.0
  %v1547 = vmax.f32 %v1469, 0.0
  %v1548 = vmax.f32 %v1471, 0.0
  %v1549 = vmax.f32 %v1474, 0.0
  %v1550 = vmax.f32 %v1476, 0.0
  %v1551 = vmax.f32 %v1479, 0.0
  %v1552 = vmax.f32 %v1481, 0.0
  %v1553 = vmax.f32 %v1484, 0.0
  %v1554 = vmax.f32 %v1486, 0.0
  %v1555 = vmax.f32 %v1489, 0.0
  %v1556 = vmax.f32 %v1491, 0.0
  %1557 = vmatpush.msra.mxu0 %v1508
  %1558 = vmatpush.msra.mxu0 %v1507
  %1559 = vmatpush.msra.mxu0 %v1506
  %1560 = vmatpush.msra.mxu0 %v1505
  %1561 = vmatpush.msra.mxu0 %v1504
  %1562 = vmatpush.msra.mxu0 %v1503
  %1563 = vmatpush.msra.mxu0 %v1502
  %1564 = vmatpush.msra.mxu0 %v1501
  %1565 = vmatpush.msra.mxu0 %v1500
  %1566 = vmatpush.msra.mxu0 %v1499
  %1567 = vmatpush.msra.mxu0 %v1498
  %1568 = vmatpush.msra.mxu0 %v1497
  %1569 = vmatpush.msra.mxu0 %v1496
  %1570 = vmatpush.msra.mxu0 %v1495
  %1571 = vmatpush.msra.mxu0 %v1494
  %1572 = vmatpush.msra.mxu0 %v1493
  %1573 = vmatmul.f32.gmra.mxu0 %v56
  %v1574 = vpop.f32.mrf.mxu0
  %v1575 = vadd.f32 0.0, %v1574
  %1576 = vdwg.mxu0
  %1577 = vmatpush.msra.mxu0 %v1524
  %1578 = vmatpush.msra.mxu0 %v1523
  %1579 = vmatpush.msra.mxu0 %v1522
  %1580 = vmatpush.msra.mxu0 %v1521
  %1581 = vmatpush.msra.mxu0 %v1520
  %1582 = vmatpush.msra.mxu0 %v1519
  %1583 = vmatpush.msra.mxu0 %v1518
  %1584 = vmatpush.msra.mxu0 %v1517
  %1585 = vmatpush.msra.mxu0 %v1516
  %1586 = vmatpush.msra.mxu0 %v1515
  %1587 = vmatpush.msra.mxu0 %v1514
  %1588 = vmatpush.msra.mxu0 %v1513
  %1589 = vmatpush.msra.mxu0 %v1512
  %1590 = vmatpush.msra.mxu0 %v1511
  %1591 = vmatpush.msra.mxu0 %v1510
  %1592 = vmatpush.msra.mxu0 %v1509
  %1593 = vmatmul.f32.gmra.mxu0 %v57
  %v1594 = vpop.f32.mrf.mxu0
  %v1595 = vadd.f32 %v1575, %v1594
  %1596 = vdwg.mxu0
  %1597 = vmatpush.msra.mxu0 %v1540
  %1598 = vmatpush.msra.mxu0 %v1539
  %1599 = vmatpush.msra.mxu0 %v1538
  %1600 = vmatpush.msra.mxu0 %v1537
  %1601 = vmatpush.msra.mxu0 %v1536
  %1602 = vmatpush.msra.mxu0 %v1535
  %1603 = vmatpush.msra.mxu0 %v1534
  %1604 = vmatpush.msra.mxu0 %v1533
  %1605 = vmatpush.msra.mxu0 %v1532
  %1606 = vmatpush.msra.mxu0 %v1531
  %1607 = vmatpush.msra.mxu0 %v1530
  %1608 = vmatpush.msra.mxu0 %v1529
  %1609 = vmatpush.msra.mxu0 %v1528
  %1610 = vmatpush.msra.mxu0 %v1527
  %1611 = vmatpush.msra.mxu0 %v1526
  %1612 = vmatpush.msra.mxu0 %v1525
  %1613 = vmatmul.f32.gmra.mxu0 %v58
  %v1614 = vpop.f32.mrf.mxu0
  %v1615 = vadd.f32 %v1595, %v1614
  %1616 = vdwg.mxu0
  %1617 = vmatpush.msra.mxu0 %v1556
  %1618 = vmatpush.msra.mxu0 %v1555
  %1619 = vmatpush.msra.mxu0 %v1554
  %1620 = vmatpush.msra.mxu0 %v1553
  %1621 = vmatpush.msra.mxu0 %v1552
  %1622 = vmatpush.msra.mxu0 %v1551
  %1623 = vmatpush.msra.mxu0 %v1550
  %1624 = vmatpush.msra.mxu0 %v1549
  %1625 = vmatpush.msra.mxu0 %v1548
  %1626 = vmatpush.msra.mxu0 %v1547
  %1627 = vmatpush.msra.mxu0 %v1546
  %1628 = vmatpush.msra.mxu0 %v1545
  %1629 = vmatpush.msra.mxu0 %v1544
  %1630 = vmatpush.msra.mxu0 %v1543
  %1631 = vmatpush.msra.mxu0 %v1542
  %1632 = vmatpush.msra.mxu0 %v1541
  %1633 = vmatmul.f32.gmra.mxu0 %v59
  %v1634 = vpop.f32.mrf.mxu0
  %v1635 = vadd.f32 %v1615, %v1634
  %1636 = vdwg.mxu0
  %v1637 = vld [vmem:[%s10] sm:$0xff]
  %v1638 = vld [vmem:[%s10 + $0x8] sm:$0xff]
  %v1639 = vld [vmem:[%s10 + $0x10] sm:$0xff]
  %v1640 = vld [vmem:[%s10 + $0x18] sm:$0xff]
  %v1641 = vld [vmem:[%s10 + $0x20] sm:$0xff]
  %v1642 = vld [vmem:[%s10 + $0x28] sm:$0xff]
  %v1643 = vld [vmem:[%s10 + $0x30] sm:$0xff]
  %v1644 = vld [vmem:[%s10 + $0x38] sm:$0xff]
  %v1645 = vld [vmem:[%s10 + $0x40] sm:$0xff]
  %v1646 = vld [vmem:[%s10 + $0x48] sm:$0xff]
  %v1647 = vld [vmem:[%s10 + $0x50] sm:$0xff]
  %v1648 = vld [vmem:[%s10 + $0x58] sm:$0xff]
  %v1649 = vld [vmem:[%s10 + $0x60] sm:$0xff]
  %v1650 = vld [vmem:[%s10 + $0x68] sm:$0xff]
  %v1651 = vld [vmem:[%s10 + $0x70] sm:$0xff]
  %v1652 = vld [vmem:[%s10 + $0x78] sm:$0xff]
  %v1653 = vld [vmem:[%s11] sm:$0x1]
  %v1655 = vperm.slane %v1653, 0
  %1657 = vmatpush.msra.mxu0 %v1652
  %1658 = vmatpush.msra.mxu0 %v1651
  %1659 = vmatpush.msra.mxu0 %v1650
  %1660 = vmatpush.msra.mxu0 %v1649
  %1661 = vmatpush.msra.mxu0 %v1648
  %1662 = vmatpush.msra.mxu0 %v1647
  %1663 = vmatpush.msra.mxu0 %v1646
  %1664 = vmatpush.msra.mxu0 %v1645
  %1665 = vmatpush.msra.mxu0 %v1644
  %1666 = vmatpush.msra.mxu0 %v1643
  %1667 = vmatpush.msra.mxu0 %v1642
  %1668 = vmatpush.msra.mxu0 %v1641
  %1669 = vmatpush.msra.mxu0 %v1640
  %1670 = vmatpush.msra.mxu0 %v1639
  %1671 = vmatpush.msra.mxu0 %v1638
  %1672 = vmatpush.msra.mxu0 %v1637
  %1673 = vmatmul.f32.gmra.mxu0 %v1635
  %v1674 = vpop.f32.mrf.mxu0
  %v1675 = vadd.f32 %v1655, %v1674
  %1676 = vdwg.mxu0
  %v1677 = vmax.f32 %v1675, 0.0
  %v1678 = vld [vmem:[%s12] sm:$0xff]
  %v1679 = vld [vmem:[%s12 + $0x8] sm:$0xff]
  %v1680 = vld [vmem:[%s12 + $0x10] sm:$0xff]
  %v1681 = vld [vmem:[%s12 + $0x18] sm:$0xff]
  %v1682 = vld [vmem:[%s12 + $0x20] sm:$0xff]
  %v1683 = vld [vmem:[%s12 + $0x28] sm:$0xff]
  %v1684 = vld [vmem:[%s12 + $0x30] sm:$0xff]
  %v1685 = vld [vmem:[%s12 + $0x38] sm:$0xff]
  %v1686 = vld [vmem:[%s12 + $0x40] sm:$0xff]
  %v1687 = vld [vmem:[%s12 + $0x48] sm:$0xff]
  %v1688 = vld [vmem:[%s12 + $0x50] sm:$0xff]
  %v1689 = vld [vmem:[%s12 + $0x58] sm:$0xff]
  %v1690 = vld [vmem:[%s12 + $0x60] sm:$0xff]
  %v1691 = vld [vmem:[%s12 + $0x68] sm:$0xff]
  %v1692 = vld [vmem:[%s12 + $0x70] sm:$0xff]
  %v1693 = vld [vmem:[%s12 + $0x78] sm:$0xff]
  %v1694 = vld [vmem:[%s13] sm:$0x1]
  %v1696 = vperm.slane %v1694, 0
  %1698 = vmatpush.msra.mxu0 %v1693
  %1699 = vmatpush.msra.mxu0 %v1692
  %1700 = vmatpush.msra.mxu0 %v1691
  %1701 = vmatpush.msra.mxu0 %v1690
  %1702 = vmatpush.msra.mxu0 %v1689
  %1703 = vmatpush.msra.mxu0 %v1688
  %1704 = vmatpush.msra.mxu0 %v1687
  %1705 = vmatpush.msra.mxu0 %v1686
  %1706 = vmatpush.msra.mxu0 %v1685
  %1707 = vmatpush.msra.mxu0 %v1684
  %1708 = vmatpush.msra.mxu0 %v1683
  %1709 = vmatpush.msra.mxu0 %v1682
  %1710 = vmatpush.msra.mxu0 %v1681
  %1711 = vmatpush.msra.mxu0 %v1680
  %1712 = vmatpush.msra.mxu0 %v1679
  %1713 = vmatpush.msra.mxu0 %v1678
  %1714 = vmatmul.f32.gmra.mxu0 %v1677
  %v1715 = vpop.f32.mrf.mxu0
  %v1716 = vadd.f32 %v1696, %v1715
  %1717 = vdwg.mxu0
  %v1718 = vxor.u32 %v1716, 2147483648
  %v1719 = vmul.f32 %v1718, 1.442695
  %v1720 = vpow.pop %v1719
  %v1721 = vadd.f32 %v1720, 1.0
  %v1722 = vrcp.pop %v1721
  %v1723 = vmul.f32 %v1721, %v1722
  %v1724 = vsub.f32 1.0, %v1723
  %v1725 = vmul.f32 %v1722, %v1724
  %v1726 = vadd.f32 %v1722, %v1725
  %vm1727 = vweird.f32 %v1721
  %vm1728 = vweird.f32 %v1722
  %vm1729 = vmor %vm1727, %vm1728
  %v1730 = vsel %vm1729, %v1722, %v1726
  %v1731 = vand.u32 2147483647, %v1721
  %vm1732 = vcmp.eq.f32.partialorder %v1731, 8.507059e+37
  %v1733 = vand.u32 %v1721, 2147483648
  %v1734 = vor.u32 1.1754944e-38, %v1733
  %v1735 = vsel %vm1732, %v1734, %v1730
  %v1736 = vmul.f32 1.0, %v1735
  %v1737 = vsel %vm66, %v1736, 0.0
  %1738 = vst [vmem:[%s18] sm:$0xff] %v1737
  %v1739 = vmul.f32 %v1635, %v1737
  %v1740 = vld [vmem:[%s14] sm:$0xff]
  %v1741 = vld [vmem:[%s14 + $0x8] sm:$0xff]
  %v1742 = vld [vmem:[%s14 + $0x10] sm:$0xff]
  %v1743 = vld [vmem:[%s14 + $0x18] sm:$0xff]
  %v1744 = vld [vmem:[%s14 + $0x20] sm:$0xff]
  %v1745 = vld [vmem:[%s14 + $0x28] sm:$0xff]
  %v1746 = vld [vmem:[%s14 + $0x30] sm:$0xff]
  %v1747 = vld [vmem:[%s14 + $0x38] sm:$0xff]
  %v1748 = vld [vmem:[%s14 + $0x40] sm:$0xff]
  %v1749 = vld [vmem:[%s14 + $0x48] sm:$0xff]
  %v1750 = vld [vmem:[%s14 + $0x50] sm:$0xff]
  %v1751 = vld [vmem:[%s14 + $0x58] sm:$0xff]
  %v1752 = vld [vmem:[%s14 + $0x60] sm:$0xff]
  %v1753 = vld [vmem:[%s14 + $0x68] sm:$0xff]
  %v1754 = vld [vmem:[%s14 + $0x70] sm:$0xff]
  %v1755 = vld [vmem:[%s14 + $0x78] sm:$0xff]
  %v1756 = vld [vmem:[%s15] sm:$0x1]
  %v1758 = vperm.slane %v1756, 0
  %1760 = vmatpush.msra.mxu0 %v1755
  %1761 = vmatpush.msra.mxu0 %v1754
  %1762 = vmatpush.msra.mxu0 %v1753
  %1763 = vmatpush.msra.mxu0 %v1752
  %1764 = vmatpush.msra.mxu0 %v1751
  %1765 = vmatpush.msra.mxu0 %v1750
  %1766 = vmatpush.msra.mxu0 %v1749
  %1767 = vmatpush.msra.mxu0 %v1748
  %1768 = vmatpush.msra.mxu0 %v1747
  %1769 = vmatpush.msra.mxu0 %v1746
  %1770 = vmatpush.msra.mxu0 %v1745
  %1771 = vmatpush.msra.mxu0 %v1744
  %1772 = vmatpush.msra.mxu0 %v1743
  %1773 = vmatpush.msra.mxu0 %v1742
  %1774 = vmatpush.msra.mxu0 %v1741
  %1775 = vmatpush.msra.mxu0 %v1740
  %1776 = vmatmul.f32.gmra.mxu0 %v1739
  %v1777 = vpop.f32.mrf.mxu0
  %v1778 = vadd.f32 %v1758, %v1777
  %1779 = vdwg.mxu0
  %1780 = vst [vmem:[%s16] sm:$0xff] %v1778
  // Predicated region
  $region66: #{se_recorder_forward.1} parent=0 // pred_check
    _
  $region67: #{se_recorder_forward.1} parent=0 // pred_check_branch
    %1782 = sbr.rel (0) target = $region69
  $region68: #{se_recorder_forward.1} parent=0 // pred_region
    _
  $region69: #{se_recorder_forward.1} parent=0 // pred_fallthru
    _
  // Predicated region
  $region70: #{se_recorder_forward.1} parent=0 // pred_check
    _
  $region71: #{se_recorder_forward.1} parent=0 // pred_check_branch
    %1784 = sbr.rel (0) target = $region73
  $region72: #{se_recorder_forward.1} parent=0 // pred_region
    _
  $region73: #{se_recorder_forward.1} parent=0 // pred_fallthru
    _
  // Predicated region
  $region74: #{se_recorder_forward.1} parent=0 // pred_check
    _
  $region75: #{se_recorder_forward.1} parent=0 // pred_check_branch
    %1786 = sbr.rel (0) target = $region77
  $region76: #{se_recorder_forward.1} parent=0 // pred_region
    _
  $region77: #{se_recorder_forward.1} parent=0 // pred_fallthru
    _
  // Predicated region
  $region78: #{se_recorder_forward.1} parent=0 // pred_check
    _
  $region79: #{se_recorder_forward.1} parent=0 // pred_check_branch
    %1788 = sbr.rel (0) target = $region81
  $region80: #{se_recorder_forward.1} parent=0 // pred_region
    _
  $region81: #{se_recorder_forward.1} parent=0 // pred_fallthru
    _
  // Predicated region
  $region82: #{se_recorder_forward.1} parent=0 // pred_check
    _
  $region83: #{se_recorder_forward.1} parent=0 // pred_check_branch
    %1790 = sbr.rel (0) target = $region85
  $region84: #{se_recorder_forward.1} parent=0 // pred_region
    _
  $region85: #{se_recorder_forward.1} parent=0 // pred_fallthru
    _
  // Predicated region
  $region86: #{se_recorder_forward.1} parent=0 // pred_check
    _
  $region87: #{se_recorder_forward.1} parent=0 // pred_check_branch
    %1792 = sbr.rel (0) target = $region89
  $region88: #{se_recorder_forward.1} parent=0 // pred_region
    _
  $region89: #{se_recorder_forward.1} parent=0 // pred_fallthru
    _

</llo_original>
